<compile_context>
chip_gen: v6e
topology: v6e:2x2x1
jax: 0.10.0
libtpu: 0.0.40
codegen_flags: <defaults>
</compile_context>

<pallas_src>
import functools

import jax
import jax.numpy as jnp
from jax import lax
from jax.experimental import pallas as pl
from jax.experimental.pallas import tpu as pltpu


def _round_up(x, m):
    return ((x + m - 1) // m) * m


@functools.lru_cache(maxsize=None)
def _vmem_limit_bytes():
    """Generation-aware scoped-VMEM limit: ~75% of physical VMEM (96 MiB on v5e/v6e,
    48 MiB on v7x). Conservative 48 MiB fallback if the hardware query is unavailable."""
    try:
        cap = int(pltpu.get_tpu_info().vmem_capacity_bytes)
        return max(32 * 1024 * 1024, min((cap * 3) // 4, 112 * 1024 * 1024))
    except Exception:
        return 48 * 1024 * 1024


@functools.lru_cache(maxsize=None)
def _weight_pipeline_mode():
    """pl.Buffered(1) for grid-invariant weight blocks (halves their resident VMEM).
    Probed once; falls back to default double-buffering if unsupported by this build."""
    if not hasattr(pl, "Buffered"):
        return None

    def _copy(x_ref, o_ref):
        o_ref[...] = x_ref[...]

    try:
        mode = pl.Buffered(1)
        fn = pl.pallas_call(
            _copy,
            out_shape=jax.ShapeDtypeStruct((8, 128), jnp.float32),
            grid=(2,),
            in_specs=[pl.BlockSpec((8, 128), lambda i: (0, 0), pipeline_mode=mode)],
            out_specs=pl.BlockSpec((8, 128), lambda i: (0, 0)),
        )
        jax.block_until_ready(fn(jnp.zeros((8, 128), jnp.float32)))
        return mode
    except Exception:
        return None


def _resident_spec(block_shape, index_map):
    """BlockSpec for a grid-invariant (weight/bias) operand: single-buffered if possible."""
    mode = _weight_pipeline_mode()
    if mode is None:
        return pl.BlockSpec(block_shape, index_map)
    return pl.BlockSpec(block_shape, index_map, pipeline_mode=mode)


# ----------------------------------------------------------------------------------
# Fused ARBlock kernel: relu(c1) -> relu(c2, k-tap dilated causal) -> relu(c3) + residual
# ----------------------------------------------------------------------------------
def _arblock_kernel(*refs, k, dilation, tm, halo_pad, has_proj):
    if has_proj:
        (x_ref, w1_ref, b1_ref, w2_ref, b2_ref, w3_ref, b3_ref,
         wp_ref, bp_ref, o_ref, h1_ref) = refs
    else:
        (x_ref, w1_ref, b1_ref, w2_ref, b2_ref, w3_ref, b3_ref,
         o_ref, h1_ref) = refs
        wp_ref = bp_ref = None

    halo = (k - 1) * dilation
    base = halo_pad - halo                              # first valid row of the h1 window
    i = pl.program_id(1)                                # row-tile index along the sequence

    # ---- c1 (1x1 conv) on the current row tile: bf16 MXU, fp32 acc, single bf16 cast ----
    x_cur = x_ref[0]                                    # (tm, Cin) bf16
    h1c = jnp.dot(x_cur, w1_ref[...], preferred_element_type=jnp.float32)
    h1c = jnp.maximum(h1c + b1_ref[...], 0.0).astype(jnp.bfloat16)
    h1_ref[halo_pad:, :] = h1c                          # 16-row aligned -> unmasked stores

    if halo > 0:
        # First tile of each sequence: Conv1d zero-pads c2's *input* (h1) before t=0.
        # Also resets the carried halo when moving to the next batch element.
        @pl.when(i == 0)
        def _():
            h1_ref[base:halo_pad, :] = jnp.zeros((halo, h1_ref.shape[1]), h1_ref.dtype)

    # ---- c2: k dilated causal taps as k accumulating MXU matmuls (no im2col) ----
    acc = None
    for j in range(k):
        tap = h1_ref[base + j * dilation: base + j * dilation + tm, :]   # bf16, no cast pass
        part = jnp.dot(tap, w2_ref[j], preferred_element_type=jnp.float32)
        acc = part if acc is None else acc + part
    h2 = jnp.maximum(acc + b2_ref[...], 0.0).astype(jnp.bfloat16)

    if halo > 0:
        # Carry the last `halo` rows of h1 to the next row tile of the SAME sequence
        # (rows axis is 'arbitrary' so grid steps run in order; i==0 resets the carry).
        h1_ref[base:halo_pad, :] = h1c[tm - halo:, :]

    # ---- c3 (1x1 conv) + residual (ReLU is applied before the residual add) ----
    h3 = jnp.dot(h2, w3_ref[...], preferred_element_type=jnp.float32)
    h3 = jnp.maximum(h3 + b3_ref[...], 0.0)
    if has_proj:
        res = jnp.dot(x_cur, wp_ref[...], preferred_element_type=jnp.float32) + bp_ref[...]
    else:
        res = x_cur.astype(jnp.float32)
    o_ref[0] = (h3 + res).astype(o_ref.dtype)


def ar_block_pallas(x, blk, k_size, *, row_tile):
    """x: [B, Lp, Cin] bf16 (Lp multiple of row_tile) -> [B, Lp, external] bf16."""
    B, Lp, Cin = x.shape
    dilation = blk["dilation"]
    halo = (k_size - 1) * dilation
    halo_pad = _round_up(halo, 16)        # keep the big h1 store sublane-aligned (bf16)
    internal = blk["w1"].shape[1]
    external = blk["w3"].shape[1]
    has_proj = blk["wp"] is not None

    assert Lp % row_tile == 0
    assert row_tile % 16 == 0, "row tile must be a multiple of 16 (bf16 sublane packing)"
    assert halo <= row_tile, (
        f"multi-tile halo unsupported: (k-1)*dilation={halo} must be <= row_tile={row_tile}")
    assert Cin % 128 == 0 and internal % 128 == 0 and external % 128 == 0, (
        "channel dims must be padded to multiples of 128 (lane width)")

    n_l = Lp // row_tile
    in_specs = [
        pl.BlockSpec((1, row_tile, Cin), lambda b, i: (b, i, 0)),
        # weights/biases: constant block index -> VMEM-resident, single-buffered if possible
        _resident_spec((Cin, internal), lambda b, i: (0, 0)),
        _resident_spec((1, internal), lambda b, i: (0, 0)),
        _resident_spec((k_size, internal, internal), lambda b, i: (0, 0, 0)),
        _resident_spec((1, internal), lambda b, i: (0, 0)),
        _resident_spec((internal, external), lambda b, i: (0, 0)),
        _resident_spec((1, external), lambda b, i: (0, 0)),
    ]
    args = [x, blk["w1"], blk["b1"], blk["w2"], blk["b2"], blk["w3"], blk["b3"]]
    if has_proj:
        in_specs += [
            _resident_spec((Cin, external), lambda b, i: (0, 0)),
            _resident_spec((1, external), lambda b, i: (0, 0)),
        ]
        args += [blk["wp"], blk["bp"]]

    kernel = functools.partial(_arblock_kernel, k=k_size, dilation=dilation,
                               tm=row_tile, halo_pad=halo_pad, has_proj=has_proj)
    return pl.pallas_call(
        kernel,
        out_shape=jax.ShapeDtypeStruct((B, Lp, external), jnp.bfloat16),
        grid_spec=pltpu.PrefetchScalarGridSpec(
            num_scalar_prefetch=0,
            grid=(B, n_l),
            in_specs=in_specs,
            out_specs=pl.BlockSpec((1, row_tile, external), lambda b, i: (b, i, 0)),
            # bf16 h1 scratch: [junk | carried halo | current tile]; persists across row tiles
            scratch_shapes=[pltpu.VMEM((halo_pad + row_tile, internal), jnp.bfloat16)],
        ),
        compiler_params=pltpu.CompilerParams(
            # batch stays 'parallel' (v7x megacore -> keep B>=2); rows must be 'arbitrary'
            # because of the carried h1 halo scratch.
            dimension_semantics=("parallel", "arbitrary"),
            vmem_limit_bytes=_vmem_limit_bytes(),
        ),
    )(*args)


# ----------------------------------------------------------------------------------
# Vocab head: tiled over (batch, seq tiles, vocab tiles); activations pre-transposed once
# to (B, E, Sp) so the kernel dot is the native MXU form and writes [B, vocab, S] directly.
# ----------------------------------------------------------------------------------
def _vocab_head_kernel(x_ref, w_ref, b_ref, o_ref):
    x = x_ref[0]                                        # (E, TS) bf16 (channels, tokens)
    w = w_ref[...]                                      # (TN, E) bf16
    y = jnp.dot(w, x, preferred_element_type=jnp.float32)   # (TN, TS), no XLU transpose
    o_ref[0] = (y + b_ref[...]).astype(o_ref.dtype)          # bias (TN,1) broadcasts over TS


def vocab_head_pallas(h, seq_len, wv_t, bv, *, tn=256, ts=256, out_dtype=jnp.float32):
    """h: [B, Ltot, E] bf16 (Ltot >= token count used), wv_t: [V, E] bf16, bv: [V, 1] f32
       -> logits [B, V, seq_len] in out_dtype (PyTorch NCL layout)."""
    B, Ltot, E = h.shape
    V = wv_t.shape[0]
    assert E % 128 == 0 and tn % 128 == 0 and ts % 128 == 0

    # Lane-dense output stores: run the head over a 128-multiple token count, slice to S after.
    Sp = _round_up(seq_len, ts)
    if Ltot >= Sp:
        h = h[:, :Sp, :]
    else:
        h = jnp.pad(h, ((0, 0), (0, Sp - Ltot), (0, 0)))
    # One wrapper-side transpose (cheap relative to the logits writeback) so the kernel
    # never re-transposes the activation tile per vocab tile.
    h_t = jnp.transpose(h, (0, 2, 1))                   # [B, E, Sp]

    Vp = _round_up(V, tn)
    if Vp != V:
        wv_t = jnp.pad(wv_t, ((0, Vp - V), (0, 0)))
        bv = jnp.pad(bv, ((0, Vp - V), (0, 0)))

    out = pl.pallas_call(
        _vocab_head_kernel,
        out_shape=jax.ShapeDtypeStruct((B, Vp, Sp), out_dtype),
        grid_spec=pltpu.PrefetchScalarGridSpec(
            num_scalar_prefetch=0,
            grid=(B, Sp // ts, Vp // tn),   # vocab innermost: activation tile is not re-DMA'd
            in_specs=[
                pl.BlockSpec((1, E, ts), lambda b, si, vj: (b, 0, si)),
                pl.BlockSpec((tn, E), lambda b, si, vj: (vj, 0)),
                pl.BlockSpec((tn, 1), lambda b, si, vj: (vj, 0)),
            ],
            out_specs=pl.BlockSpec((1, tn, ts), lambda b, si, vj: (b, vj, si)),
        ),
        compiler_params=pltpu.CompilerParams(
            dimension_semantics=("parallel", "parallel", "arbitrary"),
            vmem_limit_bytes=_vmem_limit_bytes(),
        ),
    )(h_t, wv_t, bv)
    return out[:, :V, :seq_len]                          # drop vocab/token padding (garbage rows)


# ----------------------------------------------------------------------------------
# Parameters (deterministic synthetic init; layouts match the PyTorch module).
# Weights bf16 (MXU fast path), biases fp32 (epilogue).
# ----------------------------------------------------------------------------------
def init_params(key, embed_dim, z_dim, layers_list, internal_size, external_size,
                k_size, vocab_size):
    def dense(k, cin, cout):
        kw, kb = jax.random.split(k)
        w = (jax.random.normal(kw, (cin, cout), jnp.float32) / jnp.sqrt(cin)).astype(jnp.bfloat16)
        b = jax.random.normal(kb, (1, cout), jnp.float32) * 0.01
        return w, b

    params = {"blocks": []}
    keys = jax.random.split(key, len(layers_list) + 1)
    d_in = embed_dim + z_dim
    for idx, dilation in enumerate(layers_list):
        kk = jax.random.split(keys[idx], 4)
        w1, b1 = dense(kk[0], d_in, internal_size)                     # c1: 1x1
        kw2, kb2 = jax.random.split(kk[1])
        w2 = (jax.random.normal(kw2, (k_size, internal_size, internal_size), jnp.float32)
              / jnp.sqrt(k_size * internal_size)).astype(jnp.bfloat16)
        b2 = jax.random.normal(kb2, (1, internal_size), jnp.float32) * 0.01
        w3, b3 = dense(kk[2], internal_size, external_size)            # c3: 1x1
        blk = dict(dilation=dilation, w1=w1, b1=b1, w2=w2, b2=b2, w3=w3, b3=b3)
        if d_in != external_size:                                      # c_proj needed
            wp, bp = dense(kk[3], d_in, external_size)
            blk["wp"], blk["bp"] = wp, bp
        else:
            blk["wp"], blk["bp"] = None, None
        params["blocks"].append(blk)
        d_in = external_size
    kwv, kbv = jax.random.split(keys[-1])
    wv_t = (jax.random.normal(kwv, (vocab_size, external_size), jnp.float32)
            / jnp.sqrt(external_size)).astype(jnp.bfloat16)            # pred_word, [Cout, Cin]
    bv = jax.random.normal(kbv, (vocab_size, 1), jnp.float32) * 0.01
    params["wv_t"], params["bv"] = wv_t, bv
    return params


# ----------------------------------------------------------------------------------
# Decoder forward (Pallas path): one fused pallas_call per ARBlock + tiled vocab head.
# ----------------------------------------------------------------------------------
def cnn_decoder_forward(params, x, z, k_size, *, row_tile=256, vocab_tile=256,
                        seq_tile=256, logits_dtype=jnp.float32):
    """x: [B, S, E] embeddings, z: [B, Z] context -> logits [B, vocab, S] (PyTorch NCL).

    Production tile guidance (per generation):
      v6e (128 MiB VMEM): row_tile=512, vocab_tile/seq_tile=256-512
      v7x ( 64 MiB VMEM): row_tile<=512, vocab_tile/seq_tile=256; keep B>=2 for megacore
      v5e (128 MiB VMEM): row_tile=128-256, vocab_tile=128-256; prefer logits_dtype=bf16
                          (halves the head's HBM writeback — its roofline on v5e)
    """
    B, S, _ = x.shape
    L = S + 1
    x = x.astype(jnp.bfloat16)
    z = z.astype(jnp.bfloat16)

    # dec_input: zero-prepended embeddings concatenated with broadcast z -> [B, L, E+Z]
    x_padded = jnp.pad(x, ((0, 0), (1, 0), (0, 0)))
    z_exp = jnp.broadcast_to(z[:, None, :], (B, L, z.shape[-1]))
    h = jnp.concatenate([x_padded, z_exp], axis=-1)

    # Pad the token axis ONCE to a multiple of the row tile; padded tail rows can never
    # feed valid rows (the causal conv only looks backwards) and are dropped at the head.
    Lp = _round_up(L, row_tile)
    if Lp != L:
        h = jnp.pad(h, ((0, 0), (0, Lp - L), (0, 0)))

    # TODO(synk): nn.Dropout(p=0.1) layers are identity here (inference / eval mode).
    for blk in params["blocks"]:
        h = ar_block_pallas(h, blk, k_size, row_tile=row_tile)

    # Head runs over a 128-multiple token count (lane-dense stores); pad rows contain
    # relu(bias)-propagated garbage and are sliced off inside vocab_head_pallas.
    return vocab_head_pallas(h, S, params["wv_t"], params["bv"],
                             tn=vocab_tile, ts=seq_tile, out_dtype=logits_dtype)


# ----------------------------------------------------------------------------------
# Pure-JAX fp32 reference (lax conv, mimics PyTorch nn.Conv1d exactly) for verification.
# ----------------------------------------------------------------------------------
def _torch_conv1d_ref(x_ncl, w_oik, b, dilation):
    k = w_oik.shape[-1]
    pad = (k - 1) * dilation
    out = lax.conv_general_dilated(
        x_ncl, w_oik, window_strides=(1,), padding=[(pad, pad)],
        rhs_dilation=(dilation,), dimension_numbers=("NCH", "OIH", "NCH"),
        precision=lax.Precision.HIGHEST)
    out = out + b.reshape(1, -1, 1)
    return out[:, :, : x_ncl.shape[2]]                                 # causal truncation


def reference_forward(params, x, z, k_size):
    f32 = jnp.float32
    x = x.astype(f32)
    z = z.astype(f32)
    B, S, _ = x.shape
    x_ncl = jnp.transpose(x, (0, 2, 1))                                # [B, E, S]
    x_padded = jnp.pad(x_ncl, ((0, 0), (0, 0), (1, 0)))
    z_exp = jnp.broadcast_to(z[:, :, None], (B, z.shape[1], S + 1))
    h = jnp.concatenate([x_padded, z_exp], axis=1)                     # [B, E+Z, L]
    for blk in params["blocks"]:
        x_in = h
        w1 = jnp.transpose(blk["w1"].astype(f32), (1, 0))[:, :, None]
        h1 = jax.nn.relu(_torch_conv1d_ref(x_in, w1, blk["b1"].reshape(-1), 1))
        w2 = jnp.transpose(blk["w2"].astype(f32), (2, 1, 0))           # [Cout, Cin, k]
        h2 = jax.nn.relu(_torch_conv1d_ref(h1, w2, blk["b2"].reshape(-1), blk["dilation"]))
        w3 = jnp.transpose(blk["w3"].astype(f32), (1, 0))[:, :, None]
        h3 = jax.nn.relu(_torch_conv1d_ref(h2, w3, blk["b3"].reshape(-1), 1))
        if blk["wp"] is not None:
            wp = jnp.transpose(blk["wp"].astype(f32), (1, 0))[:, :, None]
            res = _torch_conv1d_ref(x_in, wp, blk["bp"].reshape(-1), 1)
        else:
            res = x_in
        h = h3 + res
    h = h[:, :, :S]
    wv = params["wv_t"].astype(f32)[:, :, None]                        # [V, E, 1]
    return _torch_conv1d_ref(h, wv, params["bv"].reshape(-1), 1)


# ----------------------------------------------------------------------------------
if __name__ == "__main__":
    # Small but lane-aligned demo shapes: E+Z = 128, internal = 128, external = 256, V = 256.
    B, S = 2, 24
    embed_dim, z_dim = 96, 32
    layers_list = [1, 2, 4]
    internal_size, external_size = 128, 256
    k_size, vocab_size = 3, 256
    row_tile = 16          # small demo tile (multiple of 16, >= max halo of 8) so the carried
                           # halo path is exercised (2 row tiles); 256-512 in production
    vocab_tile = 128       # demo; 256+ on v6e/v7x
    seq_tile = 128         # demo; 256-512 in production (must be a multiple of 128)

    key = jax.random.PRNGKey(0)
    kp, kx, kz = jax.random.split(key, 3)
    params = init_params(kp, embed_dim, z_dim, layers_list, internal_size,
                         external_size, k_size, vocab_size)
    x = jax.random.normal(kx, (B, S, embed_dim), jnp.float32).astype(jnp.bfloat16)
    z = jax.random.normal(kz, (B, z_dim), jnp.float32).astype(jnp.bfloat16)

    out = cnn_decoder_forward(params, x, z, k_size, row_tile=row_tile,
                              vocab_tile=vocab_tile, seq_tile=seq_tile)
    out = jax.block_until_ready(out)
    assert out.shape == (B, vocab_size, S), out.shape

    ref = jax.block_until_ready(reference_forward(params, x, z, k_size))
    err = out - ref
    max_err = float(jnp.max(jnp.abs(err)))
    rms_err = float(jnp.sqrt(jnp.mean(err * err)))
    ref_max = float(jnp.max(jnp.abs(ref)))
    ref_rms = float(jnp.sqrt(jnp.mean(ref * ref)))
    # Tolerances derived from bf16 activation rounding across ~4 matmul stages x 3 blocks + head.
    assert max_err <= 0.08 * ref_max + 0.05, (max_err, ref_max)
    assert rms_err <= 0.02 * ref_rms + 0.02, (rms_err, ref_rms)

    print("KERNEL_OK")
</pallas_src>

<mosaic_0001>
module attributes {stable_mosaic.version = 11 : i64} {
  func.func @_copy(%arg0: i32, %arg1: memref<8x128xf32, #tpu.memory_space<vmem>>, %arg2: memref<8x128xf32, #tpu.memory_space<vmem>>) attributes {dimension_semantics = [#tpu.dimension_semantics<arbitrary>], iteration_bounds = array<i64: 2>, scalar_prefetch = 0 : i64, scratch_operands = 0 : i64, tpu.core_type = #tpu.core_type<tc>, window_params = [{pipeline_mode = #tpu.pipeline_mode<synchronous>, transform_indices = @transform_0, window_bounds = array<i64: 8, 128>}, {pipeline_mode = #tpu.pipeline_mode<synchronous>, transform_indices = @transform_1, window_bounds = array<i64: 8, 128>}]} {
    %c0 = arith.constant 0 : index
    %c0_0 = arith.constant 0 : index
    %0 = vector.load %arg1[%c0, %c0_0] : memref<8x128xf32, #tpu.memory_space<vmem>>, vector<8x128xf32>
    %c0_1 = arith.constant 0 : index
    %c0_2 = arith.constant 0 : index
    %1 = vector.load %arg2[%c0_1, %c0_2] : memref<8x128xf32, #tpu.memory_space<vmem>>, vector<8x128xf32>
    tpu.vector_store %arg2[%c0_1, %c0_2], %0 {strides = array<i32>} : memref<8x128xf32, #tpu.memory_space<vmem>>, vector<8x128xf32>,
    return
  }
  func.func @transform_0(%arg0: i32) -> (i32, i32) {
    %c0_i32 = arith.constant 0 : i32
    %c0_i32_0 = arith.constant 0 : i32
    %c0_i32_1 = arith.constant 0 : i32
    return %c0_i32, %c0_i32_0 : i32, i32
  }
  func.func @transform_1(%arg0: i32) -> (i32, i32) {
    %c0_i32 = arith.constant 0 : i32
    %c0_i32_0 = arith.constant 0 : i32
    %c0_i32_1 = arith.constant 0 : i32
    return %c0_i32, %c0_i32_0 : i32, i32
  }
}

module attributes {stable_mosaic.version = 11 : i64} {
  func.func @_arblock_kernel(%arg0: i32, %arg1: i32, %arg2: memref<1x16x128xbf16, #tpu.memory_space<vmem>>, %arg3: memref<128x128xbf16, #tpu.memory_space<vmem>>, %arg4: memref<1x128xf32, #tpu.memory_space<vmem>>, %arg5: memref<3x128x128xbf16, #tpu.memory_space<vmem>>, %arg6: memref<1x128xf32, #tpu.memory_space<vmem>>, %arg7: memref<128x256xbf16, #tpu.memory_space<vmem>>, %arg8: memref<1x256xf32, #tpu.memory_space<vmem>>, %arg9: memref<128x256xbf16, #tpu.memory_space<vmem>>, %arg10: memref<1x256xf32, #tpu.memory_space<vmem>>, %arg11: memref<1x16x256xbf16, #tpu.memory_space<vmem>>, %arg12: memref<32x128xbf16, #tpu.memory_space<vmem>>) attributes {dimension_semantics = [#tpu.dimension_semantics<parallel>, #tpu.dimension_semantics<arbitrary>], iteration_bounds = array<i64: 2, 2>, scalar_prefetch = 0 : i64, scratch_operands = 1 : i64, tpu.core_type = #tpu.core_type<tc>, window_params = [{transform_indices = @transform_0, window_bounds = array<i64: 1, 16, 128>}, {pipeline_mode = #tpu.pipeline_mode<synchronous>, transform_indices = @transform_1, window_bounds = array<i64: 128, 128>}, {pipeline_mode = #tpu.pipeline_mode<synchronous>, transform_indices = @transform_2, window_bounds = array<i64: 1, 128>}, {pipeline_mode = #tpu.pipeline_mode<synchronous>, transform_indices = @transform_3, window_bounds = array<i64: 3, 128, 128>}, {pipeline_mode = #tpu.pipeline_mode<synchronous>, transform_indices = @transform_4, window_bounds = array<i64: 1, 128>}, {pipeline_mode = #tpu.pipeline_mode<synchronous>, transform_indices = @transform_5, window_bounds = array<i64: 128, 256>}, {pipeline_mode = #tpu.pipeline_mode<synchronous>, transform_indices = @transform_6, window_bounds = array<i64: 1, 256>}, {pipeline_mode = #tpu.pipeline_mode<synchronous>, transform_indices = @transform_7, window_bounds = array<i64: 128, 256>}, {pipeline_mode = #tpu.pipeline_mode<synchronous>, transform_indices = @transform_8, window_bounds = array<i64: 1, 256>}, {transform_indices = @transform_9, window_bounds = array<i64: 1, 16, 256>}]} {
    %c0 = arith.constant 0 : index
    %c0_0 = arith.constant 0 : index
    %c0_1 = arith.constant 0 : index
    %0 = vector.load %arg2[%c0, %c0_0, %c0_1] : memref<1x16x128xbf16, #tpu.memory_space<vmem>>, vector<1x16x128xbf16>
    %1 = vector.shape_cast %0 : vector<1x16x128xbf16> to vector<16x128xbf16>
    %c0_2 = arith.constant 0 : index
    %c0_3 = arith.constant 0 : index
    %2 = vector.load %arg3[%c0_2, %c0_3] : memref<128x128xbf16, #tpu.memory_space<vmem>>, vector<128x128xbf16>
    %cst = arith.constant dense<0.000000e+00> : vector<16x128xf32>
    %3 = tpu.matmul %1, %2, %cst {dimension_numbers = #tpu.dot_dimension_numbers<[1], [0], [0], [1], [0, 0, 1, 1], [], []>} : vector<16x128xbf16>, vector<128x128xbf16>, vector<16x128xf32> -> vector<16x128xf32>
    %c0_4 = arith.constant 0 : index
    %c0_5 = arith.constant 0 : index
    %4 = vector.load %arg4[%c0_4, %c0_5] : memref<1x128xf32, #tpu.memory_space<vmem>>, vector<1x128xf32>
    %5 = vector.broadcast %4 : vector<1x128xf32> to vector<16x128xf32>
    %6 = arith.addf %3, %5 : vector<16x128xf32>
    %cst_6 = arith.constant 0.000000e+00 : f32
    %7 = vector.broadcast %cst_6 : f32 to vector<16x128xf32>
    %8 = arith.maximumf %6, %7 : vector<16x128xf32>
    %9 = arith.truncf %8 : vector<16x128xf32> to vector<16x128xbf16>
    %c16 = arith.constant 16 : index
    %c0_7 = arith.constant 0 : index
    %10 = vector.load %arg12[%c16, %c0_7] : memref<32x128xbf16, #tpu.memory_space<vmem>>, vector<16x128xbf16>
    tpu.vector_store %arg12[%c16, %c0_7], %9 {strides = array<i32>} : memref<32x128xbf16, #tpu.memory_space<vmem>>, vector<16x128xbf16>,
    %c0_i32 = arith.constant 0 : i32
    %11 = arith.cmpi eq, %arg1, %c0_i32 : i32
    %12 = arith.extui %11 : i1 to i32
    %c0_i32_8 = arith.constant 0 : i32
    %13 = arith.cmpi ne, %12, %c0_i32_8 : i32
    scf.if %13 {
      %cst_42 = arith.constant 0.000000e+00 : bf16
      %53 = vector.broadcast %cst_42 : bf16 to vector<2x128xbf16>
      %c14_43 = arith.constant 14 : index
      %c0_44 = arith.constant 0 : index
      %54 = vector.load %arg12[%c14_43, %c0_44] : memref<32x128xbf16, #tpu.memory_space<vmem>>, vector<2x128xbf16>
      tpu.vector_store %arg12[%c14_43, %c0_44], %53 {strides = array<i32>} : memref<32x128xbf16, #tpu.memory_space<vmem>>, vector<2x128xbf16>,
    } else {
    }
    %c14 = arith.constant 14 : index
    %c0_9 = arith.constant 0 : index
    %14 = vector.load %arg12[%c14, %c0_9] : memref<32x128xbf16, #tpu.memory_space<vmem>>, vector<16x128xbf16>
    %c0_10 = arith.constant 0 : index
    %c0_11 = arith.constant 0 : index
    %c0_12 = arith.constant 0 : index
    %15 = vector.load %arg5[%c0_10, %c0_11, %c0_12] : memref<3x128x128xbf16, #tpu.memory_space<vmem>>, vector<1x128x128xbf16>
    %16 = vector.shape_cast %15 : vector<1x128x128xbf16> to vector<128x128xbf16>
    %cst_13 = arith.constant dense<0.000000e+00> : vector<16x128xf32>
    %17 = tpu.matmul %14, %16, %cst_13 {dimension_numbers = #tpu.dot_dimension_numbers<[1], [0], [0], [1], [0, 0, 1, 1], [], []>} : vector<16x128xbf16>, vector<128x128xbf16>, vector<16x128xf32> -> vector<16x128xf32>
    %c15 = arith.constant 15 : index
    %c0_14 = arith.constant 0 : index
    %18 = vector.load %arg12[%c15, %c0_14] : memref<32x128xbf16, #tpu.memory_space<vmem>>, vector<16x128xbf16>
    %c1 = arith.constant 1 : index
    %c0_15 = arith.constant 0 : index
    %c0_16 = arith.constant 0 : index
    %19 = vector.load %arg5[%c1, %c0_15, %c0_16] : memref<3x128x128xbf16, #tpu.memory_space<vmem>>, vector<1x128x128xbf16>
    %20 = vector.shape_cast %19 : vector<1x128x128xbf16> to vector<128x128xbf16>
    %cst_17 = arith.constant dense<0.000000e+00> : vector<16x128xf32>
    %21 = tpu.matmul %18, %20, %cst_17 {dimension_numbers = #tpu.dot_dimension_numbers<[1], [0], [0], [1], [0, 0, 1, 1], [], []>} : vector<16x128xbf16>, vector<128x128xbf16>, vector<16x128xf32> -> vector<16x128xf32>
    %22 = arith.addf %17, %21 : vector<16x128xf32>
    %c16_18 = arith.constant 16 : index
    %c0_19 = arith.constant 0 : index
    %23 = vector.load %arg12[%c16_18, %c0_19] : memref<32x128xbf16, #tpu.memory_space<vmem>>, vector<16x128xbf16>
    %c2 = arith.constant 2 : index
    %c0_20 = arith.constant 0 : index
    %c0_21 = arith.constant 0 : index
    %24 = vector.load %arg5[%c2, %c0_20, %c0_21] : memref<3x128x128xbf16, #tpu.memory_space<vmem>>, vector<1x128x128xbf16>
    %25 = vector.shape_cast %24 : vector<1x128x128xbf16> to vector<128x128xbf16>
    %cst_22 = arith.constant dense<0.000000e+00> : vector<16x128xf32>
    %26 = tpu.matmul %23, %25, %cst_22 {dimension_numbers = #tpu.dot_dimension_numbers<[1], [0], [0], [1], [0, 0, 1, 1], [], []>} : vector<16x128xbf16>, vector<128x128xbf16>, vector<16x128xf32> -> vector<16x128xf32>
    %27 = arith.addf %22, %26 : vector<16x128xf32>
    %c0_23 = arith.constant 0 : index
    %c0_24 = arith.constant 0 : index
    %28 = vector.load %arg6[%c0_23, %c0_24] : memref<1x128xf32, #tpu.memory_space<vmem>>, vector<1x128xf32>
    %29 = vector.broadcast %28 : vector<1x128xf32> to vector<16x128xf32>
    %30 = arith.addf %27, %29 : vector<16x128xf32>
    %cst_25 = arith.constant 0.000000e+00 : f32
    %31 = vector.broadcast %cst_25 : f32 to vector<16x128xf32>
    %32 = arith.maximumf %30, %31 : vector<16x128xf32>
    %33 = arith.truncf %32 : vector<16x128xf32> to vector<16x128xbf16>
    %34 = vector.extract_strided_slice %9 {offsets = [14, 0], sizes = [2, 128], strides = [1, 1]} : vector<16x128xbf16> to vector<2x128xbf16>
    %c14_26 = arith.constant 14 : index
    %c0_27 = arith.constant 0 : index
    %35 = vector.load %arg12[%c14_26, %c0_27] : memref<32x128xbf16, #tpu.memory_space<vmem>>, vector<2x128xbf16>
    tpu.vector_store %arg12[%c14_26, %c0_27], %34 {strides = array<i32>} : memref<32x128xbf16, #tpu.memory_space<vmem>>, vector<2x128xbf16>,
    %c0_28 = arith.constant 0 : index
    %c0_29 = arith.constant 0 : index
    %36 = vector.load %arg7[%c0_28, %c0_29] : memref<128x256xbf16, #tpu.memory_space<vmem>>, vector<128x256xbf16>
    %cst_30 = arith.constant dense<0.000000e+00> : vector<16x256xf32>
    %37 = tpu.matmul %33, %36, %cst_30 {dimension_numbers = #tpu.dot_dimension_numbers<[1], [0], [0], [1], [0, 0, 1, 1], [], []>} : vector<16x128xbf16>, vector<128x256xbf16>, vector<16x256xf32> -> vector<16x256xf32>
    %c0_31 = arith.constant 0 : index
    %c0_32 = arith.constant 0 : index
    %38 = vector.load %arg8[%c0_31, %c0_32] : memref<1x256xf32, #tpu.memory_space<vmem>>, vector<1x256xf32>
    %39 = vector.broadcast %38 : vector<1x256xf32> to vector<16x256xf32>
    %40 = arith.addf %37, %39 : vector<16x256xf32>
    %cst_33 = arith.constant 0.000000e+00 : f32
    %41 = vector.broadcast %cst_33 : f32 to vector<16x256xf32>
    %42 = arith.maximumf %40, %41 : vector<16x256xf32>
    %c0_34 = arith.constant 0 : index
    %c0_35 = arith.constant 0 : index
    %43 = vector.load %arg9[%c0_34, %c0_35] : memref<128x256xbf16, #tpu.memory_space<vmem>>, vector<128x256xbf16>
    %cst_36 = arith.constant dense<0.000000e+00> : vector<16x256xf32>
    %44 = tpu.matmul %1, %43, %cst_36 {dimension_numbers = #tpu.dot_dimension_numbers<[1], [0], [0], [1], [0, 0, 1, 1], [], []>} : vector<16x128xbf16>, vector<128x256xbf16>, vector<16x256xf32> -> vector<16x256xf32>
    %c0_37 = arith.constant 0 : index
    %c0_38 = arith.constant 0 : index
    %45 = vector.load %arg10[%c0_37, %c0_38] : memref<1x256xf32, #tpu.memory_space<vmem>>, vector<1x256xf32>
    %46 = vector.broadcast %45 : vector<1x256xf32> to vector<16x256xf32>
    %47 = arith.addf %44, %46 : vector<16x256xf32>
    %48 = arith.addf %42, %47 : vector<16x256xf32>
    %49 = arith.truncf %48 : vector<16x256xf32> to vector<16x256xbf16>
    %c0_39 = arith.constant 0 : index
    %c0_40 = arith.constant 0 : index
    %c0_41 = arith.constant 0 : index
    %50 = vector.load %arg11[%c0_39, %c0_40, %c0_41] : memref<1x16x256xbf16, #tpu.memory_space<vmem>>, vector<1x16x256xbf16>
    %51 = vector.shape_cast %50 : vector<1x16x256xbf16> to vector<16x256xbf16>
    %52 = vector.shape_cast %49 : vector<16x256xbf16> to vector<1x16x256xbf16>
    tpu.vector_store %arg11[%c0_39, %c0_40, %c0_41], %52 {strides = array<i32>} : memref<1x16x256xbf16, #tpu.memory_space<vmem>>, vector<1x16x256xbf16>,
    return
  }
  func.func @transform_0(%arg0: i32, %arg1: i32) -> (i32, i32, i32) {
    %c0_i32 = arith.constant 0 : i32
    %c0_i32_0 = arith.constant 0 : i32
    return %arg0, %arg1, %c0_i32 : i32, i32, i32
  }
  func.func @transform_1(%arg0: i32, %arg1: i32) -> (i32, i32) {
    %c0_i32 = arith.constant 0 : i32
    %c0_i32_0 = arith.constant 0 : i32
    %c0_i32_1 = arith.constant 0 : i32
    return %c0_i32, %c0_i32_0 : i32, i32
  }
  func.func @transform_2(%arg0: i32, %arg1: i32) -> (i32, i32) {
    %c0_i32 = arith.constant 0 : i32
    %c0_i32_0 = arith.constant 0 : i32
    %c0_i32_1 = arith.constant 0 : i32
    return %c0_i32, %c0_i32_0 : i32, i32
  }
  func.func @transform_3(%arg0: i32, %arg1: i32) -> (i32, i32, i32) {
    %c0_i32 = arith.constant 0 : i32
    %c0_i32_0 = arith.constant 0 : i32
    %c0_i32_1 = arith.constant 0 : i32
    %c0_i32_2 = arith.constant 0 : i32
    return %c0_i32, %c0_i32_0, %c0_i32_1 : i32, i32, i32
  }
  func.func @transform_4(%arg0: i32, %arg1: i32) -> (i32, i32) {
    %c0_i32 = arith.constant 0 : i32
    %c0_i32_0 = arith.constant 0 : i32
    %c0_i32_1 = arith.constant 0 : i32
    return %c0_i32, %c0_i32_0 : i32, i32
  }
  func.func @transform_5(%arg0: i32, %arg1: i32) -> (i32, i32) {
    %c0_i32 = arith.constant 0 : i32
    %c0_i32_0 = arith.constant 0 : i32
    %c0_i32_1 = arith.constant 0 : i32
    return %c0_i32, %c0_i32_0 : i32, i32
  }
  func.func @transform_6(%arg0: i32, %arg1: i32) -> (i32, i32) {
    %c0_i32 = arith.constant 0 : i32
    %c0_i32_0 = arith.constant 0 : i32
    %c0_i32_1 = arith.constant 0 : i32
    return %c0_i32, %c0_i32_0 : i32, i32
  }
  func.func @transform_7(%arg0: i32, %arg1: i32) -> (i32, i32) {
    %c0_i32 = arith.constant 0 : i32
    %c0_i32_0 = arith.constant 0 : i32
    %c0_i32_1 = arith.constant 0 : i32
    return %c0_i32, %c0_i32_0 : i32, i32
  }
  func.func @transform_8(%arg0: i32, %arg1: i32) -> (i32, i32) {
    %c0_i32 = arith.constant 0 : i32
    %c0_i32_0 = arith.constant 0 : i32
    %c0_i32_1 = arith.constant 0 : i32
    return %c0_i32, %c0_i32_0 : i32, i32
  }
  func.func @transform_9(%arg0: i32, %arg1: i32) -> (i32, i32, i32) {
    %c0_i32 = arith.constant 0 : i32
    %c0_i32_0 = arith.constant 0 : i32
    return %arg0, %arg1, %c0_i32 : i32, i32, i32
  }
}

</mosaic_0001>

<llo_original>
// kernel: tpu_custom_call.1
$region0: #{tpu_custom_call.1}
  #allocation0 [shape = 'u32[]', space=smem, size = 0x4, offset = 0x4, fixed_abs, tag = 'smem constant byte address 0x4 - core index']
  #allocation1 [shape = 'u32[144,128]{1,0:T(1,128)}', space=vmem, size = 0x12000, scoped, tag = 'internal scratch']
  %s0 = inlined_call_operand.hbm [shape: f32[8,128], index: 0, kind: input, shape index: {}]
  %s1 = inlined_call_operand.hbm [shape: f32[8,128], index: 1, kind: output, shape index: {}]
  %s2 = sld [smem:[#allocation0]]
  $region41: #{tpu_custom_call.1} parent=0
    _
  %s4 = ssub.s32 1, %s2
  %s5 = scalar_select 0, %s4, %s2
  $region1: #{tpu_custom_call.1} parent=0
    #allocation2 [shape = 'u8[4096]{0}', space=vmem, size = 0x1000, scoped, tag = 'input window, operand 0, single buffered']
    #allocation3 [shape = 's32[2]{0}', space=sflag, size = 0x8, scoped, tag = 'scoped memory for tpu_custom_call.1']
    #allocation4 [shape = 's32[2]{0}', space=sflag, size = 0x8, scoped, tag = 'scoped memory for tpu_custom_call.1']
    #allocation5 [shape = 'u8[4096]{0}', space=vmem, size = 0x1000, scoped, tag = 'output window, operand 0, single buffered']
    %6 = vsyncpa [#allocation3], 0
    %7 = vsyncpa [#allocation4], 0
    loop: start=0, step=1, limit=4
    $region2: #{tpu_custom_call.1} parent=1 // loop_pre_header
      _
    $region3: #{tpu_custom_call.1} parent=1 // loop_header
      %s9 = sphi 0, %s13
      %p10 = scmp.ge.s32.totalorder %s9, 4
      %s17 = sphi 0, %s17
      %s19 = sphi 0, %s17
      %s20 = sphi 0, %s19
      %s34 = sphi 0, %s20
      %s38 = sphi 0, %s38
      %s40 = sphi 0, %s38
      %s41 = sphi 0, %s40
      %s55 = sphi 0, %s41
    $region4: #{tpu_custom_call.1} parent=1 // loop_header_branch
      %12 = sbr.rel (%p10) target = $region8
    $region5: #{tpu_custom_call.1} parent=1 // loop_body
      %s14 = ssub.s32 %s9, 1
      %s15 = ssub.s32 %s9, 2
      %s16 = sadd.s32 %s9, 1
      %s18 = sadd.s32 %s17, 1
      %p21 = scmp.eq.s32.totalorder %s9, 1
      %p22 = scmp.ne.s32.totalorder %s17, %s19
      %p23 = scmp.eq.s32.totalorder %s9, 0
      %p24 = por %p22, %p23
      %p25 = scmp.ne.s32.totalorder %s17, %s19
      %p26 = scmp.eq.s32.totalorder %s14, 1
      %p27 = por %p25, %p26
      %p28 = scmp.ne.s32.totalorder %s19, %s20
      %p29 = scmp.eq.s32.totalorder %s14, 0
      %p30 = por %p28, %p29
      %p31 = scmp.ne.s32.totalorder %s19, %s20
      %p32 = scmp.eq.s32.totalorder %s15, 1
      %p33 = por %p31, %p32
      %p35 = scmp.ne.s32.totalorder %s20, %s34
      %p36 = scmp.eq.s32.totalorder %s15, 0
      %p37 = por %p35, %p36
      %s39 = sadd.s32 %s38, 1
      %p42 = scmp.eq.s32.totalorder %s9, 1
      %p43 = scmp.ne.s32.totalorder %s38, %s40
      %p44 = scmp.eq.s32.totalorder %s9, 0
      %p45 = por %p43, %p44
      %p46 = scmp.ne.s32.totalorder %s38, %s40
      %p47 = scmp.eq.s32.totalorder %s14, 1
      %p48 = por %p46, %p47
      %p49 = scmp.ne.s32.totalorder %s40, %s41
      %p50 = scmp.eq.s32.totalorder %s14, 0
      %p51 = por %p49, %p50
      %p52 = scmp.ne.s32.totalorder %s40, %s41
      %p53 = scmp.eq.s32.totalorder %s15, 1
      %p54 = por %p52, %p53
      %p56 = scmp.ne.s32.totalorder %s41, %s55
      %p57 = scmp.eq.s32.totalorder %s15, 0
      %p58 = por %p56, %p57
      %p59 = scmp.le.s32.totalorder 1, %s9
      %p60 = scmp.lt.s32.totalorder %s9, 3
      %p61 = pnand %p59, %p60
      %p62 = pneg %p61
      // Predicated region
      $region9: #{tpu_custom_call.1} parent=5 // pred_check
        _
      $region10: #{tpu_custom_call.1} parent=5 // pred_check_branch
        %64 = sbr.rel (%p61) target = $region12
      $region11: #{tpu_custom_call.1} parent=5 // pred_region
        %s65 = ssub.s32 %s9, 1
        // Predicated region
        $region13: #{tpu_custom_call.1} parent=11 // pred_check
          %p66 = pneg %p30
        $region14: #{tpu_custom_call.1} parent=11 // pred_check_branch
          %68 = sbr.rel (%p66) target = $region16
        $region15: #{tpu_custom_call.1} parent=11 // pred_region
          %s70 = ssub.s32 128, 128
          %71 = vsyncadd [#allocation3], %s70
          %s73 = sshll.u32 [#allocation2], 4
          %s74 = int_to_ptr.vmem [resolvable:$true] %s73
          %76 = dma.hbm_to_vmem [thread:$0]  %s0, 128, %s74, [#allocation3]
        $region16: #{tpu_custom_call.1} parent=11 // pred_fallthru
          _
      $region12: #{tpu_custom_call.1} parent=5 // pred_fallthru
        _
      %p77 = scmp.lt.s32.totalorder %s9, 2
      // Predicated region
      $region17: #{tpu_custom_call.1} parent=5 // pred_check
        %p78 = pneg %p77
      $region18: #{tpu_custom_call.1} parent=5 // pred_check_branch
        %80 = sbr.rel (%p78) target = $region20
      $region19: #{tpu_custom_call.1} parent=5 // pred_region
        _
      $region20: #{tpu_custom_call.1} parent=5 // pred_fallthru
        _
      %p81 = scmp.le.s32.totalorder 1, %s9
      %p82 = scmp.lt.s32.totalorder %s9, 3
      %p83 = pnand %p81, %p82
      %p84 = pneg %p83
      // Predicated region
      $region21: #{tpu_custom_call.1} parent=5 // pred_check
        _
      $region22: #{tpu_custom_call.1} parent=5 // pred_check_branch
        %86 = sbr.rel (%p83) target = $region24
      $region23: #{tpu_custom_call.1} parent=5 // pred_region
        %s87 = ssub.s32 %s9, 1
        // Predicated region
        $region25: #{tpu_custom_call.1} parent=23 // pred_check
          %p88 = pneg %p30
        $region26: #{tpu_custom_call.1} parent=23 // pred_check_branch
          %90 = sbr.rel (%p88) target = $region28
        $region27: #{tpu_custom_call.1} parent=23 // pred_region
          %91 = dma.done [#allocation3], 128
        $region28: #{tpu_custom_call.1} parent=23 // pred_fallthru
          _
        %p92 = pneg %p30
        %p93 = pneg %p27
        %p94 = pneg %p51
        %p95 = pneg %p48
        %v96 = vld [vmem:[#allocation2] sm:$0xff]
        %97 = vst [vmem:[#allocation5] sm:$0xff] %v96
        // Predicated region
        $region29: #{tpu_custom_call.1} parent=23 // pred_check
          %p98 = pneg %p48
        $region30: #{tpu_custom_call.1} parent=23 // pred_check_branch
          %100 = sbr.rel (%p98) target = $region32
        $region31: #{tpu_custom_call.1} parent=23 // pred_region
          %s102 = ssub.s32 128, 128
          %103 = vsyncadd [#allocation4], %s102
          %s105 = sshll.u32 [#allocation5], 4
          %s106 = int_to_ptr.vmem [resolvable:$true] %s105
          %108 = dma.vmem_to_hbm [thread:$0]  %s106, 128, %s1, [#allocation4]
        $region32: #{tpu_custom_call.1} parent=23 // pred_fallthru
          _
        // Predicated region
        $region33: #{tpu_custom_call.1} parent=23 // pred_check
          %p109 = pneg %p48
        $region34: #{tpu_custom_call.1} parent=23 // pred_check_branch
          %111 = sbr.rel (%p109) target = $region36
        $region35: #{tpu_custom_call.1} parent=23 // pred_region
          %112 = dma.done [#allocation4], 128
        $region36: #{tpu_custom_call.1} parent=23 // pred_fallthru
          _
      $region24: #{tpu_custom_call.1} parent=5 // pred_fallthru
        _
      %p113 = scmp.le.s32.totalorder 2, %s9
      // Predicated region
      $region37: #{tpu_custom_call.1} parent=5 // pred_check
        %p114 = pneg %p113
      $region38: #{tpu_custom_call.1} parent=5 // pred_check_branch
        %116 = sbr.rel (%p114) target = $region40
      $region39: #{tpu_custom_call.1} parent=5 // pred_region
        %s117 = ssub.s32 %s9, 2
      $region40: #{tpu_custom_call.1} parent=5 // pred_fallthru
        _
    $region6: #{tpu_custom_call.1} parent=1 // loop_footer
      %s13 = sadd.s32 1, %s9
    $region7: #{tpu_custom_call.1} parent=1 // loop_footer_branch
      %8 = sbr.rel target = $region3
    $region8: #{tpu_custom_call.1} parent=1 // loop_exit
      _
    %118 = vsyncpa [#allocation3], 1
    %s119 = scalar_lea.sflag [#allocation3], 1
    %120 = vsyncpa %s119, 1
    %121 = vsyncpa [#allocation4], 1
    %s122 = scalar_lea.sflag [#allocation4], 1
    %123 = vsyncpa %s122, 1

// kernel: tpu_custom_call.1
$region0: #{tpu_custom_call.1}
  #allocation0 [shape = 'u32[]', space=smem, size = 0x4, offset = 0x4, fixed_abs, tag = 'smem constant byte address 0x4 - core index']
  #allocation1 [shape = 'u32[144,128]{1,0:T(1,128)}', space=vmem, size = 0x12000, scoped, tag = 'internal scratch']
  #allocation2 [shape = 'bf16[32,128]{1,0:T(8,128)(2,1)}', space=vmem, size = 0x2000, scoped, tag = 'scratch operand']
  %s0 = inlined_call_operand.hbm [shape: bf16[2,32,128], index: 0, kind: input, shape index: {}]
  %s1 = inlined_call_operand.hbm [shape: bf16[128,128], index: 1, kind: input, shape index: {}]
  %s2 = inlined_call_operand.vmem [shape: f32[1,128], index: 2, kind: input, shape index: {}]
  %s3 = inlined_call_operand.hbm [shape: bf16[3,128,128], index: 3, kind: input, shape index: {}]
  %s4 = inlined_call_operand.vmem [shape: f32[1,128], index: 4, kind: input, shape index: {}]
  %s5 = inlined_call_operand.hbm [shape: bf16[128,256], index: 5, kind: input, shape index: {}]
  %s6 = inlined_call_operand.vmem [shape: f32[1,256], index: 6, kind: input, shape index: {}]
  %s7 = inlined_call_operand.hbm [shape: bf16[128,256], index: 7, kind: input, shape index: {}]
  %s8 = inlined_call_operand.vmem [shape: f32[1,256], index: 8, kind: input, shape index: {}]
  %s9 = inlined_call_operand.hbm [shape: bf16[2,32,256], index: 9, kind: output, shape index: {}]
  %s10 = sld [smem:[#allocation0]]
  $region93: #{tpu_custom_call.1} parent=0
    _
  %s12 = ssub.s32 1, %s10
  %s13 = scalar_select 0, %s12, %s10
  $region1: #{tpu_custom_call.1} parent=0
    #allocation3 [shape = 'u8[8192]{0}', space=vmem, size = 0x2000, scoped, tag = 'input window, operand 0']
    #allocation4 [shape = 's32[2]{0}', space=sflag, size = 0x8, scoped, tag = 'scoped memory for tpu_custom_call.1']
    #allocation5 [shape = 's32[2]{0}', space=sflag, size = 0x8, scoped, tag = 'scoped memory for tpu_custom_call.1']
    #allocation6 [shape = 'u8[32768]{0}', space=vmem, size = 0x8000, scoped, tag = 'input window, operand 1, single buffered']
    #allocation7 [shape = 's32[1]{0}', space=sflag, size = 0x4, scoped, tag = 'scoped memory for tpu_custom_call.1']
    #allocation8 [shape = 'u8[98304]{0}', space=vmem, size = 0x18000, scoped, tag = 'input window, operand 3, single buffered']
    #allocation9 [shape = 'u8[65536]{0}', space=vmem, size = 0x10000, scoped, tag = 'input window, operand 5, single buffered']
    #allocation10 [shape = 's32[1]{0}', space=sflag, size = 0x4, scoped, tag = 'scoped memory for tpu_custom_call.1']
    #allocation11 [shape = 'u8[65536]{0}', space=vmem, size = 0x10000, scoped, tag = 'input window, operand 7, single buffered']
    #allocation12 [shape = 'u8[16384]{0}', space=vmem, size = 0x4000, scoped, tag = 'output window, operand 0']
    %14 = vsyncpa [#allocation4], 0
    %s15 = scalar_lea.sflag [#allocation4], 1
    %16 = vsyncpa %s15, 0
    %17 = vsyncpa [#allocation7], 0
    %18 = vsyncpa [#allocation10], 0
    %19 = vsyncpa [#allocation5], 0
    %s20 = scalar_lea.sflag [#allocation5], 1
    %21 = vsyncpa %s20, 0
    loop: start=0, step=1, limit=6
    $region2: #{tpu_custom_call.1} parent=1 // loop_pre_header
      _
    $region3: #{tpu_custom_call.1} parent=1 // loop_header
      %s23 = sphi 0, %s27
      %p24 = scmp.ge.s32.totalorder %s23, 6
      %s30 = sphi 0, %s42
      %s31 = sphi 0, %s38
      %s32 = sphi 0, %s30
      %s33 = sphi 0, %s31
      %s34 = sphi 0, %s32
      %s35 = sphi 0, %s33
      %s47 = sphi 0, %s49
      %s50 = sphi 0, %s47
      %s51 = sphi 0, %s50
      %s67 = sphi 0, %s51
      %s71 = sphi 0, %s71
      %s73 = sphi 0, %s71
      %s74 = sphi 0, %s73
      %s88 = sphi 0, %s74
      %s92 = sphi 0, %s92
      %s94 = sphi 0, %s92
      %s95 = sphi 0, %s94
      %s109 = sphi 0, %s95
      %s113 = sphi 0, %s113
      %s115 = sphi 0, %s113
      %s116 = sphi 0, %s115
      %s130 = sphi 0, %s116
      %s134 = sphi 0, %s134
      %s136 = sphi 0, %s134
      %s137 = sphi 0, %s136
      %s151 = sphi 0, %s137
      %s155 = sphi 0, %s155
      %s157 = sphi 0, %s155
      %s158 = sphi 0, %s157
      %s172 = sphi 0, %s158
      %s176 = sphi 0, %s176
      %s178 = sphi 0, %s176
      %s179 = sphi 0, %s178
      %s193 = sphi 0, %s179
      %s197 = sphi 0, %s197
      %s199 = sphi 0, %s197
      %s200 = sphi 0, %s199
      %s214 = sphi 0, %s200
      %s218 = sphi 0, %s218
      %s220 = sphi 0, %s218
      %s221 = sphi 0, %s220
      %s235 = sphi 0, %s221
      %s243 = sphi 0, %s245
      %s246 = sphi 0, %s243
      %s247 = sphi 0, %s246
      %s263 = sphi 0, %s247
    $region4: #{tpu_custom_call.1} parent=1 // loop_header_branch
      %26 = sbr.rel (%p24) target = $region8
    $region5: #{tpu_custom_call.1} parent=1 // loop_body
      %s28 = ssub.s32 %s23, 1
      %s29 = ssub.s32 %s23, 2
      %s36 = sadd.s32 1, %s31
      %p37 = scmp.ge.s32.totalorder %s36, 2
      %s38 = scalar_select %p37, 0, %s36
      %s39 = sadd.s32 1, %s30
      %s40 = scalar_select %p37, %s39, %s30
      %p41 = scmp.ge.s32.totalorder %s40, 2
      %s42 = scalar_select %p41, 0, %s40
      %s43 = ssub.s32 %s30, %s42
      %s44 = ssub.s32 %s31, %s38
      %s45 = sor.u32 %s43, %s44
      %p46 = scmp.eq.s32.totalorder %s45, 0
      %s48 = sadd.s32 %s47, 1
      %s49 = scalar_select %p46, %s47, %s48
      %p52 = pneg %p46
      %p53 = scmp.eq.s32.totalorder %s23, 3
      %p54 = por %p52, %p53
      %p55 = scmp.ne.s32.totalorder %s47, %s50
      %p56 = scmp.eq.s32.totalorder %s23, 0
      %p57 = por %p55, %p56
      %p58 = scmp.ne.s32.totalorder %s47, %s50
      %p59 = scmp.eq.s32.totalorder %s28, 3
      %p60 = por %p58, %p59
      %p61 = scmp.ne.s32.totalorder %s50, %s51
      %p62 = scmp.eq.s32.totalorder %s28, 0
      %p63 = por %p61, %p62
      %p64 = scmp.ne.s32.totalorder %s50, %s51
      %p65 = scmp.eq.s32.totalorder %s29, 3
      %p66 = por %p64, %p65
      %p68 = scmp.ne.s32.totalorder %s51, %s67
      %p69 = scmp.eq.s32.totalorder %s29, 0
      %p70 = por %p68, %p69
      %s72 = sadd.s32 %s71, 1
      %p75 = scmp.eq.s32.totalorder %s23, 3
      %p76 = scmp.ne.s32.totalorder %s71, %s73
      %p77 = scmp.eq.s32.totalorder %s23, 0
      %p78 = por %p76, %p77
      %p79 = scmp.ne.s32.totalorder %s71, %s73
      %p80 = scmp.eq.s32.totalorder %s28, 3
      %p81 = por %p79, %p80
      %p82 = scmp.ne.s32.totalorder %s73, %s74
      %p83 = scmp.eq.s32.totalorder %s28, 0
      %p84 = por %p82, %p83
      %p85 = scmp.ne.s32.totalorder %s73, %s74
      %p86 = scmp.eq.s32.totalorder %s29, 3
      %p87 = por %p85, %p86
      %p89 = scmp.ne.s32.totalorder %s74, %s88
      %p90 = scmp.eq.s32.totalorder %s29, 0
      %p91 = por %p89, %p90
      %s93 = sadd.s32 %s92, 1
      %p96 = scmp.eq.s32.totalorder %s23, 3
      %p97 = scmp.ne.s32.totalorder %s92, %s94
      %p98 = scmp.eq.s32.totalorder %s23, 0
      %p99 = por %p97, %p98
      %p100 = scmp.ne.s32.totalorder %s92, %s94
      %p101 = scmp.eq.s32.totalorder %s28, 3
      %p102 = por %p100, %p101
      %p103 = scmp.ne.s32.totalorder %s94, %s95
      %p104 = scmp.eq.s32.totalorder %s28, 0
      %p105 = por %p103, %p104
      %p106 = scmp.ne.s32.totalorder %s94, %s95
      %p107 = scmp.eq.s32.totalorder %s29, 3
      %p108 = por %p106, %p107
      %p110 = scmp.ne.s32.totalorder %s95, %s109
      %p111 = scmp.eq.s32.totalorder %s29, 0
      %p112 = por %p110, %p111
      %s114 = sadd.s32 %s113, 1
      %p117 = scmp.eq.s32.totalorder %s23, 3
      %p118 = scmp.ne.s32.totalorder %s113, %s115
      %p119 = scmp.eq.s32.totalorder %s23, 0
      %p120 = por %p118, %p119
      %p121 = scmp.ne.s32.totalorder %s113, %s115
      %p122 = scmp.eq.s32.totalorder %s28, 3
      %p123 = por %p121, %p122
      %p124 = scmp.ne.s32.totalorder %s115, %s116
      %p125 = scmp.eq.s32.totalorder %s28, 0
      %p126 = por %p124, %p125
      %p127 = scmp.ne.s32.totalorder %s115, %s116
      %p128 = scmp.eq.s32.totalorder %s29, 3
      %p129 = por %p127, %p128
      %p131 = scmp.ne.s32.totalorder %s116, %s130
      %p132 = scmp.eq.s32.totalorder %s29, 0
      %p133 = por %p131, %p132
      %s135 = sadd.s32 %s134, 1
      %p138 = scmp.eq.s32.totalorder %s23, 3
      %p139 = scmp.ne.s32.totalorder %s134, %s136
      %p140 = scmp.eq.s32.totalorder %s23, 0
      %p141 = por %p139, %p140
      %p142 = scmp.ne.s32.totalorder %s134, %s136
      %p143 = scmp.eq.s32.totalorder %s28, 3
      %p144 = por %p142, %p143
      %p145 = scmp.ne.s32.totalorder %s136, %s137
      %p146 = scmp.eq.s32.totalorder %s28, 0
      %p147 = por %p145, %p146
      %p148 = scmp.ne.s32.totalorder %s136, %s137
      %p149 = scmp.eq.s32.totalorder %s29, 3
      %p150 = por %p148, %p149
      %p152 = scmp.ne.s32.totalorder %s137, %s151
      %p153 = scmp.eq.s32.totalorder %s29, 0
      %p154 = por %p152, %p153
      %s156 = sadd.s32 %s155, 1
      %p159 = scmp.eq.s32.totalorder %s23, 3
      %p160 = scmp.ne.s32.totalorder %s155, %s157
      %p161 = scmp.eq.s32.totalorder %s23, 0
      %p162 = por %p160, %p161
      %p163 = scmp.ne.s32.totalorder %s155, %s157
      %p164 = scmp.eq.s32.totalorder %s28, 3
      %p165 = por %p163, %p164
      %p166 = scmp.ne.s32.totalorder %s157, %s158
      %p167 = scmp.eq.s32.totalorder %s28, 0
      %p168 = por %p166, %p167
      %p169 = scmp.ne.s32.totalorder %s157, %s158
      %p170 = scmp.eq.s32.totalorder %s29, 3
      %p171 = por %p169, %p170
      %p173 = scmp.ne.s32.totalorder %s158, %s172
      %p174 = scmp.eq.s32.totalorder %s29, 0
      %p175 = por %p173, %p174
      %s177 = sadd.s32 %s176, 1
      %p180 = scmp.eq.s32.totalorder %s23, 3
      %p181 = scmp.ne.s32.totalorder %s176, %s178
      %p182 = scmp.eq.s32.totalorder %s23, 0
      %p183 = por %p181, %p182
      %p184 = scmp.ne.s32.totalorder %s176, %s178
      %p185 = scmp.eq.s32.totalorder %s28, 3
      %p186 = por %p184, %p185
      %p187 = scmp.ne.s32.totalorder %s178, %s179
      %p188 = scmp.eq.s32.totalorder %s28, 0
      %p189 = por %p187, %p188
      %p190 = scmp.ne.s32.totalorder %s178, %s179
      %p191 = scmp.eq.s32.totalorder %s29, 3
      %p192 = por %p190, %p191
      %p194 = scmp.ne.s32.totalorder %s179, %s193
      %p195 = scmp.eq.s32.totalorder %s29, 0
      %p196 = por %p194, %p195
      %s198 = sadd.s32 %s197, 1
      %p201 = scmp.eq.s32.totalorder %s23, 3
      %p202 = scmp.ne.s32.totalorder %s197, %s199
      %p203 = scmp.eq.s32.totalorder %s23, 0
      %p204 = por %p202, %p203
      %p205 = scmp.ne.s32.totalorder %s197, %s199
      %p206 = scmp.eq.s32.totalorder %s28, 3
      %p207 = por %p205, %p206
      %p208 = scmp.ne.s32.totalorder %s199, %s200
      %p209 = scmp.eq.s32.totalorder %s28, 0
      %p210 = por %p208, %p209
      %p211 = scmp.ne.s32.totalorder %s199, %s200
      %p212 = scmp.eq.s32.totalorder %s29, 3
      %p213 = por %p211, %p212
      %p215 = scmp.ne.s32.totalorder %s200, %s214
      %p216 = scmp.eq.s32.totalorder %s29, 0
      %p217 = por %p215, %p216
      %s219 = sadd.s32 %s218, 1
      %p222 = scmp.eq.s32.totalorder %s23, 3
      %p223 = scmp.ne.s32.totalorder %s218, %s220
      %p224 = scmp.eq.s32.totalorder %s23, 0
      %p225 = por %p223, %p224
      %p226 = scmp.ne.s32.totalorder %s218, %s220
      %p227 = scmp.eq.s32.totalorder %s28, 3
      %p228 = por %p226, %p227
      %p229 = scmp.ne.s32.totalorder %s220, %s221
      %p230 = scmp.eq.s32.totalorder %s28, 0
      %p231 = por %p229, %p230
      %p232 = scmp.ne.s32.totalorder %s220, %s221
      %p233 = scmp.eq.s32.totalorder %s29, 3
      %p234 = por %p232, %p233
      %p236 = scmp.ne.s32.totalorder %s221, %s235
      %p237 = scmp.eq.s32.totalorder %s29, 0
      %p238 = por %p236, %p237
      %s239 = ssub.s32 %s30, %s42
      %s240 = ssub.s32 %s31, %s38
      %s241 = sor.u32 %s239, %s240
      %p242 = scmp.eq.s32.totalorder %s241, 0
      %s244 = sadd.s32 %s243, 1
      %s245 = scalar_select %p242, %s243, %s244
      %p248 = pneg %p242
      %p249 = scmp.eq.s32.totalorder %s23, 3
      %p250 = por %p248, %p249
      %p251 = scmp.ne.s32.totalorder %s243, %s246
      %p252 = scmp.eq.s32.totalorder %s23, 0
      %p253 = por %p251, %p252
      %p254 = scmp.ne.s32.totalorder %s243, %s246
      %p255 = scmp.eq.s32.totalorder %s28, 3
      %p256 = por %p254, %p255
      %p257 = scmp.ne.s32.totalorder %s246, %s247
      %p258 = scmp.eq.s32.totalorder %s28, 0
      %p259 = por %p257, %p258
      %p260 = scmp.ne.s32.totalorder %s246, %s247
      %p261 = scmp.eq.s32.totalorder %s29, 3
      %p262 = por %p260, %p261
      %p264 = scmp.ne.s32.totalorder %s247, %s263
      %p265 = scmp.eq.s32.totalorder %s29, 0
      %p266 = por %p264, %p265
      %p267 = scmp.le.s32.totalorder 1, %s23
      %p268 = scmp.lt.s32.totalorder %s23, 5
      %p269 = pnand %p267, %p268
      %p270 = pneg %p269
      // Predicated region
      $region9: #{tpu_custom_call.1} parent=5 // pred_check
        _
      $region10: #{tpu_custom_call.1} parent=5 // pred_check_branch
        %272 = sbr.rel (%p269) target = $region12
      $region11: #{tpu_custom_call.1} parent=5 // pred_region
        %s273 = ssub.s32 %s23, 1
        // Predicated region
        $region13: #{tpu_custom_call.1} parent=11 // pred_check
          %p274 = pneg %p84
        $region14: #{tpu_custom_call.1} parent=11 // pred_check_branch
          %276 = sbr.rel (%p274) target = $region16
        $region15: #{tpu_custom_call.1} parent=11 // pred_region
          %s278 = ssub.s32 1024, 1024
          %279 = vsyncadd [#allocation7], %s278
          %s280 = sshll.u32 [#allocation6], 4
          %s281 = int_to_ptr.vmem [resolvable:$true] %s280
          %286 = dma.hbm_to_vmem [thread:$0]  %s1, 1024, %s281, [#allocation7], 64, 64, 4
        $region16: #{tpu_custom_call.1} parent=11 // pred_fallthru
          _
        // Predicated region
        $region17: #{tpu_custom_call.1} parent=11 // pred_check
          %p287 = pneg %p105
        $region18: #{tpu_custom_call.1} parent=11 // pred_check_branch
          %289 = sbr.rel (%p287) target = $region20
        $region19: #{tpu_custom_call.1} parent=11 // pred_region
          _
        $region20: #{tpu_custom_call.1} parent=11 // pred_fallthru
          _
        // Predicated region
        $region21: #{tpu_custom_call.1} parent=11 // pred_check
          %p290 = pneg %p126
        $region22: #{tpu_custom_call.1} parent=11 // pred_check_branch
          %292 = sbr.rel (%p290) target = $region24
        $region23: #{tpu_custom_call.1} parent=11 // pred_region
          %s294 = ssub.s32 3072, 3072
          %295 = vsyncadd [#allocation7], %s294
          %s296 = sshll.u32 [#allocation8], 4
          %s297 = int_to_ptr.vmem [resolvable:$true] %s296
          %302 = dma.hbm_to_vmem [thread:$0]  %s3, 3072, %s297, [#allocation7], 64, 64, 4
        $region24: #{tpu_custom_call.1} parent=11 // pred_fallthru
          _
        // Predicated region
        $region25: #{tpu_custom_call.1} parent=11 // pred_check
          %p303 = pneg %p147
        $region26: #{tpu_custom_call.1} parent=11 // pred_check_branch
          %305 = sbr.rel (%p303) target = $region28
        $region27: #{tpu_custom_call.1} parent=11 // pred_region
          _
        $region28: #{tpu_custom_call.1} parent=11 // pred_fallthru
          _
        // Predicated region
        $region29: #{tpu_custom_call.1} parent=11 // pred_check
          %p306 = pneg %p168
        $region30: #{tpu_custom_call.1} parent=11 // pred_check_branch
          %308 = sbr.rel (%p306) target = $region32
        $region31: #{tpu_custom_call.1} parent=11 // pred_region
          %s310 = ssub.s32 2048, 2048
          %311 = vsyncadd [#allocation10], %s310
          %s312 = sshll.u32 [#allocation9], 4
          %s313 = int_to_ptr.vmem [resolvable:$true] %s312
          %318 = dma.hbm_to_vmem [thread:$0]  %s5, 2048, %s313, [#allocation10], 128, 128, 8
        $region32: #{tpu_custom_call.1} parent=11 // pred_fallthru
          _
        // Predicated region
        $region33: #{tpu_custom_call.1} parent=11 // pred_check
          %p319 = pneg %p189
        $region34: #{tpu_custom_call.1} parent=11 // pred_check_branch
          %321 = sbr.rel (%p319) target = $region36
        $region35: #{tpu_custom_call.1} parent=11 // pred_region
          _
        $region36: #{tpu_custom_call.1} parent=11 // pred_fallthru
          _
        // Predicated region
        $region37: #{tpu_custom_call.1} parent=11 // pred_check
          %p322 = pneg %p210
        $region38: #{tpu_custom_call.1} parent=11 // pred_check_branch
          %324 = sbr.rel (%p322) target = $region40
        $region39: #{tpu_custom_call.1} parent=11 // pred_region
          %s326 = ssub.s32 2048, 2048
          %327 = vsyncadd [#allocation10], %s326
          %s328 = sshll.u32 [#allocation11], 4
          %s329 = int_to_ptr.vmem [resolvable:$true] %s328
          %334 = dma.hbm_to_vmem [thread:$0]  %s7, 2048, %s329, [#allocation10], 128, 128, 8
        $region40: #{tpu_custom_call.1} parent=11 // pred_fallthru
          _
        // Predicated region
        $region41: #{tpu_custom_call.1} parent=11 // pred_check
          %p335 = pneg %p231
        $region42: #{tpu_custom_call.1} parent=11 // pred_check_branch
          %337 = sbr.rel (%p335) target = $region44
        $region43: #{tpu_custom_call.1} parent=11 // pred_region
          _
        $region44: #{tpu_custom_call.1} parent=11 // pred_fallthru
          _
      $region12: #{tpu_custom_call.1} parent=5 // pred_fallthru
        _
      %p338 = scmp.lt.s32.totalorder %s23, 4
      // Predicated region
      $region45: #{tpu_custom_call.1} parent=5 // pred_check
        %p339 = pneg %p338
      $region46: #{tpu_custom_call.1} parent=5 // pred_check_branch
        %341 = sbr.rel (%p339) target = $region48
      $region47: #{tpu_custom_call.1} parent=5 // pred_region
        // Predicated region
        $region49: #{tpu_custom_call.1} parent=47 // pred_check
          %p342 = pneg %p57
        $region50: #{tpu_custom_call.1} parent=47 // pred_check_branch
          %344 = sbr.rel (%p342) target = $region52
        $region51: #{tpu_custom_call.1} parent=47 // pred_region
          %s345 = sand.u32 %s47, 1
          %s346 = scalar_lea.sflag [#allocation4], %s345
          %s347 = sand.u32 %s47, 1
          %s348 = smul.addr %s347, 8
          %s349 = scalar_lea.vmem [#allocation3], %s348
          %s350 = smul.u32 2, %s31
          %s352 = ssub.s32 128, 128
          %353 = vsyncadd %s346, %s352
          %s354 = smul.addr %s30, 4
          %s355 = sadd.s32 %s350, %s354
          %s356 = smul.addr %s355, 64
          %s357 = scalar_lea.hbm %s0, %s356
          %s358 = sshll.u32 %s349, 4
          %s359 = int_to_ptr.vmem [resolvable:$true] %s358
          %364 = dma.hbm_to_vmem [thread:$0]  %s357, 128, %s359, %s346, 64, 64, 4
        $region52: #{tpu_custom_call.1} parent=47 // pred_fallthru
          _
      $region48: #{tpu_custom_call.1} parent=5 // pred_fallthru
        _
      %p365 = scmp.le.s32.totalorder 1, %s23
      %p366 = scmp.lt.s32.totalorder %s23, 5
      %p367 = pnand %p365, %p366
      %p368 = pneg %p367
      // Predicated region
      $region53: #{tpu_custom_call.1} parent=5 // pred_check
        _
      $region54: #{tpu_custom_call.1} parent=5 // pred_check_branch
        %370 = sbr.rel (%p367) target = $region56
      $region55: #{tpu_custom_call.1} parent=5 // pred_region
        %s371 = ssub.s32 %s23, 1
        %s372 = sand.u32 %s50, 1
        %s373 = scalar_lea.sflag [#allocation4], %s372
        %s374 = sand.u32 %s50, 1
        %s375 = smul.addr %s374, 8
        %s376 = scalar_lea.vmem [#allocation3], %s375
        // Predicated region
        $region57: #{tpu_custom_call.1} parent=55 // pred_check
          %p377 = pneg %p63
        $region58: #{tpu_custom_call.1} parent=55 // pred_check_branch
          %379 = sbr.rel (%p377) target = $region60
        $region59: #{tpu_custom_call.1} parent=55 // pred_region
          %380 = dma.done %s373, 128
        $region60: #{tpu_custom_call.1} parent=55 // pred_fallthru
          _
        // Predicated region
        $region61: #{tpu_custom_call.1} parent=55 // pred_check
          %p381 = pneg %p84
        $region62: #{tpu_custom_call.1} parent=55 // pred_check_branch
          %383 = sbr.rel (%p381) target = $region64
        $region63: #{tpu_custom_call.1} parent=55 // pred_region
          %384 = dma.done [#allocation7], 1024
        $region64: #{tpu_custom_call.1} parent=55 // pred_fallthru
          _
        // Predicated region
        $region65: #{tpu_custom_call.1} parent=55 // pred_check
          %p385 = pneg %p126
        $region66: #{tpu_custom_call.1} parent=55 // pred_check_branch
          %387 = sbr.rel (%p385) target = $region68
        $region67: #{tpu_custom_call.1} parent=55 // pred_region
          %388 = dma.done [#allocation7], 3072
        $region68: #{tpu_custom_call.1} parent=55 // pred_fallthru
          _
        // Predicated region
        $region69: #{tpu_custom_call.1} parent=55 // pred_check
          %p389 = pneg %p168
        $region70: #{tpu_custom_call.1} parent=55 // pred_check_branch
          %391 = sbr.rel (%p389) target = $region72
        $region71: #{tpu_custom_call.1} parent=55 // pred_region
          %392 = dma.done [#allocation10], 2048
        $region72: #{tpu_custom_call.1} parent=55 // pred_fallthru
          _
        // Predicated region
        $region73: #{tpu_custom_call.1} parent=55 // pred_check
          %p393 = pneg %p210
        $region74: #{tpu_custom_call.1} parent=55 // pred_check_branch
          %395 = sbr.rel (%p393) target = $region76
        $region75: #{tpu_custom_call.1} parent=55 // pred_region
          %396 = dma.done [#allocation10], 2048
        $region76: #{tpu_custom_call.1} parent=55 // pred_fallthru
          _
        %s397 = sand.u32 %s50, 1
        %s398 = scalar_lea.sflag [#allocation4], %s397
        %s399 = sand.u32 %s50, 1
        %s400 = smul.addr %s399, 8
        %s401 = scalar_lea.vmem [#allocation3], %s400
        %p402 = pneg %p63
        %p403 = pneg %p60
        %p404 = pneg %p84
        %p405 = pneg %p81
        %p406 = pneg %p105
        %p407 = pneg %p102
        %p408 = pneg %p126
        %p409 = pneg %p123
        %p410 = pneg %p147
        %p411 = pneg %p144
        %p412 = pneg %p168
        %p413 = pneg %p165
        %p414 = pneg %p189
        %p415 = pneg %p186
        %p416 = pneg %p210
        %p417 = pneg %p207
        %p418 = pneg %p231
        %p419 = pneg %p228
        %p420 = pneg %p259
        %p421 = pneg %p256
        %s422 = sand.u32 %s246, 1
        %s423 = scalar_lea.sflag [#allocation5], %s422
        %s424 = sand.u32 %s246, 1
        %s425 = smul.addr %s424, 16
        %s426 = scalar_lea.vmem [#allocation12], %s425
        %s427 = smul.u32 2, %s33
        %s428 = smul.u32 2, %s33
        %v430 = vld [vmem:[%s376] sm:$0xf]
        %v431 = vld [vmem:[%s376 + $0x4] sm:$0xf]
        %v432 = vld [vmem:[#allocation6] sm:$0xf]
        %v433 = vld [vmem:[#allocation6 + $0x4] sm:$0xf]
        %v434 = vld [vmem:[#allocation6 + $0x8] sm:$0xf]
        %v435 = vld [vmem:[#allocation6 + $0xc] sm:$0xf]
        %v436 = vld [vmem:[#allocation6 + $0x10] sm:$0xf]
        %v437 = vld [vmem:[#allocation6 + $0x14] sm:$0xf]
        %v438 = vld [vmem:[#allocation6 + $0x18] sm:$0xf]
        %v439 = vld [vmem:[#allocation6 + $0x1c] sm:$0xf]
        %v440 = vld [vmem:[#allocation6 + $0x20] sm:$0xf]
        %v441 = vld [vmem:[#allocation6 + $0x24] sm:$0xf]
        %v442 = vld [vmem:[#allocation6 + $0x28] sm:$0xf]
        %v443 = vld [vmem:[#allocation6 + $0x2c] sm:$0xf]
        %v444 = vld [vmem:[#allocation6 + $0x30] sm:$0xf]
        %v445 = vld [vmem:[#allocation6 + $0x34] sm:$0xf]
        %v446 = vld [vmem:[#allocation6 + $0x38] sm:$0xf]
        %v447 = vld [vmem:[#allocation6 + $0x3c] sm:$0xf]
        %v448 = vld [vmem:[%s2] sm:$0x1]
        %v450 = vlaneseq
        %v451 = vshrl.u32 %v450, 7
        %v452 = vsub.s32 0, %v451
        %v453 = vrot.slane %v448, %v452
        %v457 = vunpack.c.l.b16 %v430
        %v458 = vunpack.c.l.b16 %v431
        %v459 = vpack.c.b16 %v458, %v457
        %v477 = vunpack.c.l.b16 %v432
        %v478 = vunpack.c.l.b16 %v433
        %v479 = vunpack.c.l.b16 %v434
        %v480 = vunpack.c.l.b16 %v435
        %v481 = vunpack.c.l.b16 %v436
        %v482 = vunpack.c.l.b16 %v437
        %v483 = vunpack.c.l.b16 %v438
        %v484 = vunpack.c.l.b16 %v439
        %v485 = vunpack.c.l.b16 %v440
        %v486 = vunpack.c.l.b16 %v441
        %v487 = vunpack.c.l.b16 %v442
        %v488 = vunpack.c.l.b16 %v443
        %v489 = vunpack.c.l.b16 %v444
        %v490 = vunpack.c.l.b16 %v445
        %v491 = vunpack.c.l.b16 %v446
        %v492 = vunpack.c.l.b16 %v447
        %v493 = vpack.c.b16 %v478, %v477
        %v494 = vpack.c.b16 %v480, %v479
        %v495 = vpack.c.b16 %v482, %v481
        %v496 = vpack.c.b16 %v484, %v483
        %v497 = vpack.c.b16 %v486, %v485
        %v498 = vpack.c.b16 %v488, %v487
        %v499 = vpack.c.b16 %v490, %v489
        %v500 = vpack.c.b16 %v492, %v491
        %509 = vmatprep.subr.bf16.mxu0 0
        %510 = vmatpush1.bf16.msra.mxu0 %v500
        %511 = vmatprep.subr.bf16.mxu0 0
        %512 = vmatpush1.bf16.msra.mxu0 %v499
        %513 = vmatprep.subr.bf16.mxu0 0
        %514 = vmatpush1.bf16.msra.mxu0 %v498
        %515 = vmatprep.subr.bf16.mxu0 0
        %516 = vmatpush1.bf16.msra.mxu0 %v497
        %517 = vmatprep.subr.bf16.mxu0 0
        %518 = vmatpush1.bf16.msra.mxu0 %v496
        %519 = vmatprep.subr.bf16.mxu0 0
        %520 = vmatpush1.bf16.msra.mxu0 %v495
        %521 = vmatprep.subr.bf16.mxu0 0
        %522 = vmatpush1.bf16.msra.mxu0 %v494
        %523 = vmatprep.subr.bf16.mxu0 0
        %524 = vmatpush1.bf16.msra.mxu0 %v493
        %525 = vmatprep.subr.bf16.mxu0 0
        %526 = vmatpush2.bf16.msra.mxu0 0
        %527 = vmatprep.subr.bf16.mxu0 0
        %528 = vmatpush2.bf16.msra.mxu0 0
        %529 = vmatprep.subr.bf16.mxu0 0
        %530 = vmatpush2.bf16.msra.mxu0 0
        %531 = vmatprep.subr.bf16.mxu0 0
        %532 = vmatpush2.bf16.msra.mxu0 0
        %533 = vmatprep.subr.bf16.mxu0 0
        %534 = vmatpush2.bf16.msra.mxu0 0
        %535 = vmatprep.subr.bf16.mxu0 0
        %536 = vmatpush2.bf16.msra.mxu0 0
        %537 = vmatprep.subr.bf16.mxu0 0
        %538 = vmatpush2.bf16.msra.mxu0 0
        %539 = vmatprep.subr.bf16.mxu0 0
        %540 = vmatpush2.bf16.msra.mxu0 0
        %541 = vmatprep.mubr.bf16.mxu0 0
        %542 = vmatmul.mubr.bf16.gmra.mxu0 %v459
        %v543 = vpop.f32.mrf.mxu0
        %v544 = vadd.f32 %v453, %v543
        %v545 = vpop.f32.mrf.mxu0
        %v546 = vpop.f32.mrf.mxu0
        %v547 = vadd.f32 %v453, %v546
        %v548 = vpop.f32.mrf.mxu0
        %549 = vdwg.mxu0
        %v550 = vmax.f32 %v544, 0.0
        %v551 = vmax.f32 %v547, 0.0
        %v552 = vpack.c.bf16 %v551, %v550
        %v554 = vunpack.c.l.b16 %v552
        %v555 = vunpack.c.h.b16 %v552
        %v556 = vpack.c.b16 %v554, %v554
        %v557 = vpack.c.b16 %v555, %v555
        %560 = vst [vmem:[#allocation2 + $0x8] sm:$0xf] %v556
        %561 = vst [vmem:[#allocation2 + $0xc] sm:$0xf] %v557
        %p562 = scmp.eq.s32.totalorder %s33, 0
        // Predicated region
        $region77: #{tpu_custom_call.1} parent=55 // pred_check
          %p563 = pneg %p562
        $region78: #{tpu_custom_call.1} parent=55 // pred_check_branch
          %565 = sbr.rel (%p563) target = $region80
        $region79: #{tpu_custom_call.1} parent=55 // pred_region
          %566 = vst [vmem:[#allocation2 + $0x4] sm:$0x8] 0
        $region80: #{tpu_custom_call.1} parent=55 // pred_fallthru
          _
        %v567 = vld [vmem:[#allocation2 + $0x4] sm:$0x8]
        %v568 = vld [vmem:[#allocation2 + $0x8] sm:$0xf]
        %v569 = vld [vmem:[#allocation2 + $0xc] sm:$0x7]
        %v570 = vld [vmem:[#allocation8] sm:$0xf]
        %v571 = vld [vmem:[#allocation8 + $0x4] sm:$0xf]
        %v572 = vld [vmem:[#allocation8 + $0x8] sm:$0xf]
        %v573 = vld [vmem:[#allocation8 + $0xc] sm:$0xf]
        %v574 = vld [vmem:[#allocation8 + $0x10] sm:$0xf]
        %v575 = vld [vmem:[#allocation8 + $0x14] sm:$0xf]
        %v576 = vld [vmem:[#allocation8 + $0x18] sm:$0xf]
        %v577 = vld [vmem:[#allocation8 + $0x1c] sm:$0xf]
        %v578 = vld [vmem:[#allocation8 + $0x20] sm:$0xf]
        %v579 = vld [vmem:[#allocation8 + $0x24] sm:$0xf]
        %v580 = vld [vmem:[#allocation8 + $0x28] sm:$0xf]
        %v581 = vld [vmem:[#allocation8 + $0x2c] sm:$0xf]
        %v582 = vld [vmem:[#allocation8 + $0x30] sm:$0xf]
        %v583 = vld [vmem:[#allocation8 + $0x34] sm:$0xf]
        %v584 = vld [vmem:[#allocation8 + $0x38] sm:$0xf]
        %v585 = vld [vmem:[#allocation8 + $0x3c] sm:$0xf]
        %v586 = vld [vmem:[#allocation2 + $0xc] sm:$0xf]
        %s587 = scalar_lea.vmem [#allocation8], 64
        %v588 = vld [vmem:[%s587] sm:$0xf]
        %v589 = vld [vmem:[%s587 + $0x4] sm:$0xf]
        %v590 = vld [vmem:[%s587 + $0x8] sm:$0xf]
        %v591 = vld [vmem:[%s587 + $0xc] sm:$0xf]
        %v592 = vld [vmem:[%s587 + $0x10] sm:$0xf]
        %v593 = vld [vmem:[%s587 + $0x14] sm:$0xf]
        %v594 = vld [vmem:[%s587 + $0x18] sm:$0xf]
        %v595 = vld [vmem:[%s587 + $0x1c] sm:$0xf]
        %v596 = vld [vmem:[%s587 + $0x20] sm:$0xf]
        %v597 = vld [vmem:[%s587 + $0x24] sm:$0xf]
        %v598 = vld [vmem:[%s587 + $0x28] sm:$0xf]
        %v599 = vld [vmem:[%s587 + $0x2c] sm:$0xf]
        %v600 = vld [vmem:[%s587 + $0x30] sm:$0xf]
        %v601 = vld [vmem:[%s587 + $0x34] sm:$0xf]
        %v602 = vld [vmem:[%s587 + $0x38] sm:$0xf]
        %v603 = vld [vmem:[%s587 + $0x3c] sm:$0xf]
        %v607 = vunpack.c.l.b16 %v567
        %v608 = vunpack.c.l.b16 %v568
        %v609 = vunpack.c.l.b16 %v586
        %v610 = vpack.c.b16 %v608, %v607
        %v611 = vpack.c.b16 %v609, %v609
        %vm612 = vsmask.f32 4352
        %v614 = vshrl.u32 %v610, 16
        %v616 = vrot.slane %v614, 3
        %v617 = vshll.u32 %v610, 16
        %v619 = vrot.slane %v617, 4
        %v620 = vor.u32 %v616, %v619
        %v622 = vshrl.u32 %v611, 16
        %v624 = vrot.slane %v622, 3
        %v625 = vshll.u32 %v611, 16
        %v627 = vrot.slane %v625, 4
        %v628 = vor.u32 %v624, %v627
        %v629 = vsel %vm612, %v620, %v628
        %v647 = vunpack.c.l.b16 %v588
        %v648 = vunpack.c.l.b16 %v589
        %v649 = vunpack.c.l.b16 %v590
        %v650 = vunpack.c.l.b16 %v591
        %v651 = vunpack.c.l.b16 %v592
        %v652 = vunpack.c.l.b16 %v593
        %v653 = vunpack.c.l.b16 %v594
        %v654 = vunpack.c.l.b16 %v595
        %v655 = vunpack.c.l.b16 %v596
        %v656 = vunpack.c.l.b16 %v597
        %v657 = vunpack.c.l.b16 %v598
        %v658 = vunpack.c.l.b16 %v599
        %v659 = vunpack.c.l.b16 %v600
        %v660 = vunpack.c.l.b16 %v601
        %v661 = vunpack.c.l.b16 %v602
        %v662 = vunpack.c.l.b16 %v603
        %v663 = vpack.c.b16 %v648, %v647
        %v664 = vpack.c.b16 %v650, %v649
        %v665 = vpack.c.b16 %v652, %v651
        %v666 = vpack.c.b16 %v654, %v653
        %v667 = vpack.c.b16 %v656, %v655
        %v668 = vpack.c.b16 %v658, %v657
        %v669 = vpack.c.b16 %v660, %v659
        %v670 = vpack.c.b16 %v662, %v661
        %679 = vmatprep.subr.bf16.mxu0 0
        %680 = vmatpush1.bf16.msra.mxu0 %v670
        %681 = vmatprep.subr.bf16.mxu0 0
        %682 = vmatpush1.bf16.msra.mxu0 %v669
        %683 = vmatprep.subr.bf16.mxu0 0
        %684 = vmatpush1.bf16.msra.mxu0 %v668
        %685 = vmatprep.subr.bf16.mxu0 0
        %686 = vmatpush1.bf16.msra.mxu0 %v667
        %687 = vmatprep.subr.bf16.mxu0 0
        %688 = vmatpush1.bf16.msra.mxu0 %v666
        %689 = vmatprep.subr.bf16.mxu0 0
        %690 = vmatpush1.bf16.msra.mxu0 %v665
        %691 = vmatprep.subr.bf16.mxu0 0
        %692 = vmatpush1.bf16.msra.mxu0 %v664
        %693 = vmatprep.subr.bf16.mxu0 0
        %694 = vmatpush1.bf16.msra.mxu0 %v663
        %695 = vmatprep.subr.bf16.mxu0 0
        %696 = vmatpush2.bf16.msra.mxu0 0
        %697 = vmatprep.subr.bf16.mxu0 0
        %698 = vmatpush2.bf16.msra.mxu0 0
        %699 = vmatprep.subr.bf16.mxu0 0
        %700 = vmatpush2.bf16.msra.mxu0 0
        %701 = vmatprep.subr.bf16.mxu0 0
        %702 = vmatpush2.bf16.msra.mxu0 0
        %703 = vmatprep.subr.bf16.mxu0 0
        %704 = vmatpush2.bf16.msra.mxu0 0
        %705 = vmatprep.subr.bf16.mxu0 0
        %706 = vmatpush2.bf16.msra.mxu0 0
        %707 = vmatprep.subr.bf16.mxu0 0
        %708 = vmatpush2.bf16.msra.mxu0 0
        %709 = vmatprep.subr.bf16.mxu0 0
        %710 = vmatpush2.bf16.msra.mxu0 0
        %711 = vmatprep.mubr.bf16.mxu0 0
        %712 = vmatmul.mubr.bf16.gmra.mxu0 %v629
        %v713 = vpop.f32.mrf.mxu0
        %v714 = vadd.f32 0.0, %v713
        %v715 = vpop.f32.mrf.mxu0
        %v716 = vpop.f32.mrf.mxu0
        %v717 = vadd.f32 0.0, %v716
        %v718 = vpop.f32.mrf.mxu0
        %719 = vdwg.mxu0
        %v721 = vunpack.c.l.b16 %v569
        %v722 = vpack.c.b16 %v721, %v721
        %vm723 = vcmask 1044480
        %v724 = vrot.slane %v610, 3
        %v725 = vrot.slane %v722, 3
        %v726 = vsel %vm723, %v724, %v725
        %v744 = vunpack.c.l.b16 %v570
        %v745 = vunpack.c.l.b16 %v571
        %v746 = vunpack.c.l.b16 %v572
        %v747 = vunpack.c.l.b16 %v573
        %v748 = vunpack.c.l.b16 %v574
        %v749 = vunpack.c.l.b16 %v575
        %v750 = vunpack.c.l.b16 %v576
        %v751 = vunpack.c.l.b16 %v577
        %v752 = vunpack.c.l.b16 %v578
        %v753 = vunpack.c.l.b16 %v579
        %v754 = vunpack.c.l.b16 %v580
        %v755 = vunpack.c.l.b16 %v581
        %v756 = vunpack.c.l.b16 %v582
        %v757 = vunpack.c.l.b16 %v583
        %v758 = vunpack.c.l.b16 %v584
        %v759 = vunpack.c.l.b16 %v585
        %v760 = vpack.c.b16 %v745, %v744
        %v761 = vpack.c.b16 %v747, %v746
        %v762 = vpack.c.b16 %v749, %v748
        %v763 = vpack.c.b16 %v751, %v750
        %v764 = vpack.c.b16 %v753, %v752
        %v765 = vpack.c.b16 %v755, %v754
        %v766 = vpack.c.b16 %v757, %v756
        %v767 = vpack.c.b16 %v759, %v758
        %776 = vmatprep.subr.bf16.mxu0 0
        %777 = vmatpush1.bf16.msra.mxu0 %v767
        %778 = vmatprep.subr.bf16.mxu0 0
        %779 = vmatpush1.bf16.msra.mxu0 %v766
        %780 = vmatprep.subr.bf16.mxu0 0
        %781 = vmatpush1.bf16.msra.mxu0 %v765
        %782 = vmatprep.subr.bf16.mxu0 0
        %783 = vmatpush1.bf16.msra.mxu0 %v764
        %784 = vmatprep.subr.bf16.mxu0 0
        %785 = vmatpush1.bf16.msra.mxu0 %v763
        %786 = vmatprep.subr.bf16.mxu0 0
        %787 = vmatpush1.bf16.msra.mxu0 %v762
        %788 = vmatprep.subr.bf16.mxu0 0
        %789 = vmatpush1.bf16.msra.mxu0 %v761
        %790 = vmatprep.subr.bf16.mxu0 0
        %791 = vmatpush1.bf16.msra.mxu0 %v760
        %792 = vmatprep.subr.bf16.mxu0 0
        %793 = vmatpush2.bf16.msra.mxu0 0
        %794 = vmatprep.subr.bf16.mxu0 0
        %795 = vmatpush2.bf16.msra.mxu0 0
        %796 = vmatprep.subr.bf16.mxu0 0
        %797 = vmatpush2.bf16.msra.mxu0 0
        %798 = vmatprep.subr.bf16.mxu0 0
        %799 = vmatpush2.bf16.msra.mxu0 0
        %800 = vmatprep.subr.bf16.mxu0 0
        %801 = vmatpush2.bf16.msra.mxu0 0
        %802 = vmatprep.subr.bf16.mxu0 0
        %803 = vmatpush2.bf16.msra.mxu0 0
        %804 = vmatprep.subr.bf16.mxu0 0
        %805 = vmatpush2.bf16.msra.mxu0 0
        %806 = vmatprep.subr.bf16.mxu0 0
        %807 = vmatpush2.bf16.msra.mxu0 0
        %808 = vmatprep.mubr.bf16.mxu0 0
        %809 = vmatmul.mubr.bf16.gmra.mxu0 %v726
        %v810 = vpop.f32.mrf.mxu0
        %v811 = vadd.f32 %v714, %v810
        %v812 = vpop.f32.mrf.mxu0
        %v813 = vpop.f32.mrf.mxu0
        %v814 = vadd.f32 %v717, %v813
        %v815 = vpop.f32.mrf.mxu0
        %816 = vdwg.mxu0
        %s817 = scalar_lea.vmem [#allocation8], 128
        %v818 = vld [vmem:[%s817] sm:$0xf]
        %v819 = vld [vmem:[%s817 + $0x4] sm:$0xf]
        %v820 = vld [vmem:[%s817 + $0x8] sm:$0xf]
        %v821 = vld [vmem:[%s817 + $0xc] sm:$0xf]
        %v822 = vld [vmem:[%s817 + $0x10] sm:$0xf]
        %v823 = vld [vmem:[%s817 + $0x14] sm:$0xf]
        %v824 = vld [vmem:[%s817 + $0x18] sm:$0xf]
        %v825 = vld [vmem:[%s817 + $0x1c] sm:$0xf]
        %v826 = vld [vmem:[%s817 + $0x20] sm:$0xf]
        %v827 = vld [vmem:[%s817 + $0x24] sm:$0xf]
        %v828 = vld [vmem:[%s817 + $0x28] sm:$0xf]
        %v829 = vld [vmem:[%s817 + $0x2c] sm:$0xf]
        %v830 = vld [vmem:[%s817 + $0x30] sm:$0xf]
        %v831 = vld [vmem:[%s817 + $0x34] sm:$0xf]
        %v832 = vld [vmem:[%s817 + $0x38] sm:$0xf]
        %v833 = vld [vmem:[%s817 + $0x3c] sm:$0xf]
        %v834 = vpack.c.b16 %v609, %v608
        %v852 = vunpack.c.l.b16 %v818
        %v853 = vunpack.c.l.b16 %v819
        %v854 = vunpack.c.l.b16 %v820
        %v855 = vunpack.c.l.b16 %v821
        %v856 = vunpack.c.l.b16 %v822
        %v857 = vunpack.c.l.b16 %v823
        %v858 = vunpack.c.l.b16 %v824
        %v859 = vunpack.c.l.b16 %v825
        %v860 = vunpack.c.l.b16 %v826
        %v861 = vunpack.c.l.b16 %v827
        %v862 = vunpack.c.l.b16 %v828
        %v863 = vunpack.c.l.b16 %v829
        %v864 = vunpack.c.l.b16 %v830
        %v865 = vunpack.c.l.b16 %v831
        %v866 = vunpack.c.l.b16 %v832
        %v867 = vunpack.c.l.b16 %v833
        %v868 = vpack.c.b16 %v853, %v852
        %v869 = vpack.c.b16 %v855, %v854
        %v870 = vpack.c.b16 %v857, %v856
        %v871 = vpack.c.b16 %v859, %v858
        %v872 = vpack.c.b16 %v861, %v860
        %v873 = vpack.c.b16 %v863, %v862
        %v874 = vpack.c.b16 %v865, %v864
        %v875 = vpack.c.b16 %v867, %v866
        %884 = vmatprep.subr.bf16.mxu0 0
        %885 = vmatpush1.bf16.msra.mxu0 %v875
        %886 = vmatprep.subr.bf16.mxu0 0
        %887 = vmatpush1.bf16.msra.mxu0 %v874
        %888 = vmatprep.subr.bf16.mxu0 0
        %889 = vmatpush1.bf16.msra.mxu0 %v873
        %890 = vmatprep.subr.bf16.mxu0 0
        %891 = vmatpush1.bf16.msra.mxu0 %v872
        %892 = vmatprep.subr.bf16.mxu0 0
        %893 = vmatpush1.bf16.msra.mxu0 %v871
        %894 = vmatprep.subr.bf16.mxu0 0
        %895 = vmatpush1.bf16.msra.mxu0 %v870
        %896 = vmatprep.subr.bf16.mxu0 0
        %897 = vmatpush1.bf16.msra.mxu0 %v869
        %898 = vmatprep.subr.bf16.mxu0 0
        %899 = vmatpush1.bf16.msra.mxu0 %v868
        %900 = vmatprep.subr.bf16.mxu0 0
        %901 = vmatpush2.bf16.msra.mxu0 0
        %902 = vmatprep.subr.bf16.mxu0 0
        %903 = vmatpush2.bf16.msra.mxu0 0
        %904 = vmatprep.subr.bf16.mxu0 0
        %905 = vmatpush2.bf16.msra.mxu0 0
        %906 = vmatprep.subr.bf16.mxu0 0
        %907 = vmatpush2.bf16.msra.mxu0 0
        %908 = vmatprep.subr.bf16.mxu0 0
        %909 = vmatpush2.bf16.msra.mxu0 0
        %910 = vmatprep.subr.bf16.mxu0 0
        %911 = vmatpush2.bf16.msra.mxu0 0
        %912 = vmatprep.subr.bf16.mxu0 0
        %913 = vmatpush2.bf16.msra.mxu0 0
        %914 = vmatprep.subr.bf16.mxu0 0
        %915 = vmatpush2.bf16.msra.mxu0 0
        %916 = vmatprep.mubr.bf16.mxu0 0
        %917 = vmatmul.mubr.bf16.gmra.mxu0 %v834
        %v918 = vpop.f32.mrf.mxu0
        %v919 = vadd.f32 0.0, %v918
        %v920 = vpop.f32.mrf.mxu0
        %v921 = vpop.f32.mrf.mxu0
        %v922 = vadd.f32 0.0, %v921
        %v923 = vpop.f32.mrf.mxu0
        %924 = vdwg.mxu0
        %v925 = vadd.f32 %v811, %v919
        %v926 = vadd.f32 %v814, %v922
        %v927 = vld [vmem:[%s4] sm:$0x1]
        %v929 = vlaneseq
        %v930 = vshrl.u32 %v929, 7
        %v931 = vsub.s32 0, %v930
        %v932 = vrot.slane %v927, %v931
        %v934 = vadd.f32 %v925, %v932
        %v935 = vadd.f32 %v926, %v932
        %v936 = vmax.f32 %v934, 0.0
        %v937 = vmax.f32 %v935, 0.0
        %v938 = vpack.c.bf16 %v937, %v936
        %939 = vst [vmem:[#allocation2 + $0x4] sm:$0x8] %v557
        %v940 = vld [vmem:[#allocation9] sm:$0xff]
        %v941 = vld [vmem:[#allocation9 + $0x8] sm:$0xff]
        %v942 = vld [vmem:[#allocation9 + $0x10] sm:$0xff]
        %v943 = vld [vmem:[#allocation9 + $0x18] sm:$0xff]
        %v944 = vld [vmem:[#allocation9 + $0x20] sm:$0xff]
        %v945 = vld [vmem:[#allocation9 + $0x28] sm:$0xff]
        %v946 = vld [vmem:[#allocation9 + $0x30] sm:$0xff]
        %v947 = vld [vmem:[#allocation9 + $0x38] sm:$0xff]
        %v948 = vld [vmem:[#allocation9 + $0x40] sm:$0xff]
        %v949 = vld [vmem:[#allocation9 + $0x48] sm:$0xff]
        %v950 = vld [vmem:[#allocation9 + $0x50] sm:$0xff]
        %v951 = vld [vmem:[#allocation9 + $0x58] sm:$0xff]
        %v952 = vld [vmem:[#allocation9 + $0x60] sm:$0xff]
        %v953 = vld [vmem:[#allocation9 + $0x68] sm:$0xff]
        %v954 = vld [vmem:[#allocation9 + $0x70] sm:$0xff]
        %v955 = vld [vmem:[#allocation9 + $0x78] sm:$0xff]
        %v956 = vld [vmem:[%s6] sm:$0x3]
        %v958 = vlaneseq
        %v959 = vshrl.u32 %v958, 7
        %v960 = vsub.s32 0, %v959
        %v961 = vrot.slane %v956, %v960
        %v962 = vlaneseq
        %v963 = vshrl.u32 %v962, 7
        %v964 = vsub.s32 1, %v963
        %v965 = vrot.slane %v956, %v964
        %v984 = vunpack.c.l.b16 %v940
        %v985 = vunpack.c.h.b16 %v940
        %v986 = vunpack.c.l.b16 %v941
        %v987 = vunpack.c.h.b16 %v941
        %v988 = vunpack.c.l.b16 %v942
        %v989 = vunpack.c.h.b16 %v942
        %v990 = vunpack.c.l.b16 %v943
        %v991 = vunpack.c.h.b16 %v943
        %v992 = vunpack.c.l.b16 %v944
        %v993 = vunpack.c.h.b16 %v944
        %v994 = vunpack.c.l.b16 %v945
        %v995 = vunpack.c.h.b16 %v945
        %v996 = vunpack.c.l.b16 %v946
        %v997 = vunpack.c.h.b16 %v946
        %v998 = vunpack.c.l.b16 %v947
        %v999 = vunpack.c.h.b16 %v947
        %v1000 = vunpack.c.l.b16 %v948
        %v1001 = vunpack.c.h.b16 %v948
        %v1002 = vunpack.c.l.b16 %v949
        %v1003 = vunpack.c.h.b16 %v949
        %v1004 = vunpack.c.l.b16 %v950
        %v1005 = vunpack.c.h.b16 %v950
        %v1006 = vunpack.c.l.b16 %v951
        %v1007 = vunpack.c.h.b16 %v951
        %v1008 = vunpack.c.l.b16 %v952
        %v1009 = vunpack.c.h.b16 %v952
        %v1010 = vunpack.c.l.b16 %v953
        %v1011 = vunpack.c.h.b16 %v953
        %v1012 = vunpack.c.l.b16 %v954
        %v1013 = vunpack.c.h.b16 %v954
        %v1014 = vunpack.c.l.b16 %v955
        %v1015 = vunpack.c.h.b16 %v955
        %v1016 = vpack.c.b16 %v986, %v984
        %v1017 = vpack.c.b16 %v987, %v985
        %v1018 = vpack.c.b16 %v990, %v988
        %v1019 = vpack.c.b16 %v991, %v989
        %v1020 = vpack.c.b16 %v994, %v992
        %v1021 = vpack.c.b16 %v995, %v993
        %v1022 = vpack.c.b16 %v998, %v996
        %v1023 = vpack.c.b16 %v999, %v997
        %v1024 = vpack.c.b16 %v1002, %v1000
        %v1025 = vpack.c.b16 %v1003, %v1001
        %v1026 = vpack.c.b16 %v1006, %v1004
        %v1027 = vpack.c.b16 %v1007, %v1005
        %v1028 = vpack.c.b16 %v1010, %v1008
        %v1029 = vpack.c.b16 %v1011, %v1009
        %v1030 = vpack.c.b16 %v1014, %v1012
        %v1031 = vpack.c.b16 %v1015, %v1013
        %1048 = vmatprep.subr.bf16.mxu0 %v1031
        %1049 = vmatpush1.bf16.msra.mxu0 %v1030
        %1050 = vmatprep.subr.bf16.mxu0 %v1029
        %1051 = vmatpush1.bf16.msra.mxu0 %v1028
        %1052 = vmatprep.subr.bf16.mxu0 %v1027
        %1053 = vmatpush1.bf16.msra.mxu0 %v1026
        %1054 = vmatprep.subr.bf16.mxu0 %v1025
        %1055 = vmatpush1.bf16.msra.mxu0 %v1024
        %1056 = vmatprep.subr.bf16.mxu0 %v1023
        %1057 = vmatpush1.bf16.msra.mxu0 %v1022
        %1058 = vmatprep.subr.bf16.mxu0 %v1021
        %1059 = vmatpush1.bf16.msra.mxu0 %v1020
        %1060 = vmatprep.subr.bf16.mxu0 %v1019
        %1061 = vmatpush1.bf16.msra.mxu0 %v1018
        %1062 = vmatprep.subr.bf16.mxu0 %v1017
        %1063 = vmatpush1.bf16.msra.mxu0 %v1016
        %1064 = vmatprep.subr.bf16.mxu0 0
        %1065 = vmatpush2.bf16.msra.mxu0 0
        %1066 = vmatprep.subr.bf16.mxu0 0
        %1067 = vmatpush2.bf16.msra.mxu0 0
        %1068 = vmatprep.subr.bf16.mxu0 0
        %1069 = vmatpush2.bf16.msra.mxu0 0
        %1070 = vmatprep.subr.bf16.mxu0 0
        %1071 = vmatpush2.bf16.msra.mxu0 0
        %1072 = vmatprep.subr.bf16.mxu0 0
        %1073 = vmatpush2.bf16.msra.mxu0 0
        %1074 = vmatprep.subr.bf16.mxu0 0
        %1075 = vmatpush2.bf16.msra.mxu0 0
        %1076 = vmatprep.subr.bf16.mxu0 0
        %1077 = vmatpush2.bf16.msra.mxu0 0
        %1078 = vmatprep.subr.bf16.mxu0 0
        %1079 = vmatpush2.bf16.msra.mxu0 0
        %1080 = vmatprep.mubr.bf16.mxu0 0
        %1081 = vmatmul.mubr.bf16.gmra.mxu0 %v938
        %v1082 = vpop.f32.mrf.mxu0
        %v1083 = vadd.f32 %v961, %v1082
        %v1084 = vpop.f32.mrf.mxu0
        %v1085 = vadd.f32 %v965, %v1084
        %v1086 = vpop.f32.mrf.mxu0
        %v1087 = vadd.f32 %v961, %v1086
        %v1088 = vpop.f32.mrf.mxu0
        %v1089 = vadd.f32 %v965, %v1088
        %1090 = vdwg.mxu0
        %v1091 = vmax.f32 %v1083, 0.0
        %v1092 = vmax.f32 %v1085, 0.0
        %v1093 = vmax.f32 %v1087, 0.0
        %v1094 = vmax.f32 %v1089, 0.0
        %v1095 = vld [vmem:[#allocation11] sm:$0xff]
        %v1096 = vld [vmem:[#allocation11 + $0x8] sm:$0xff]
        %v1097 = vld [vmem:[#allocation11 + $0x10] sm:$0xff]
        %v1098 = vld [vmem:[#allocation11 + $0x18] sm:$0xff]
        %v1099 = vld [vmem:[#allocation11 + $0x20] sm:$0xff]
        %v1100 = vld [vmem:[#allocation11 + $0x28] sm:$0xff]
        %v1101 = vld [vmem:[#allocation11 + $0x30] sm:$0xff]
        %v1102 = vld [vmem:[#allocation11 + $0x38] sm:$0xff]
        %v1103 = vld [vmem:[#allocation11 + $0x40] sm:$0xff]
        %v1104 = vld [vmem:[#allocation11 + $0x48] sm:$0xff]
        %v1105 = vld [vmem:[#allocation11 + $0x50] sm:$0xff]
        %v1106 = vld [vmem:[#allocation11 + $0x58] sm:$0xff]
        %v1107 = vld [vmem:[#allocation11 + $0x60] sm:$0xff]
        %v1108 = vld [vmem:[#allocation11 + $0x68] sm:$0xff]
        %v1109 = vld [vmem:[#allocation11 + $0x70] sm:$0xff]
        %v1110 = vld [vmem:[#allocation11 + $0x78] sm:$0xff]
        %v1111 = vld [vmem:[%s8] sm:$0x3]
        %v1113 = vlaneseq
        %v1114 = vshrl.u32 %v1113, 7
        %v1115 = vsub.s32 0, %v1114
        %v1116 = vrot.slane %v1111, %v1115
        %v1117 = vlaneseq
        %v1118 = vshrl.u32 %v1117, 7
        %v1119 = vsub.s32 1, %v1118
        %v1120 = vrot.slane %v1111, %v1119
        %v1139 = vunpack.c.l.b16 %v1095
        %v1140 = vunpack.c.h.b16 %v1095
        %v1141 = vunpack.c.l.b16 %v1096
        %v1142 = vunpack.c.h.b16 %v1096
        %v1143 = vunpack.c.l.b16 %v1097
        %v1144 = vunpack.c.h.b16 %v1097
        %v1145 = vunpack.c.l.b16 %v1098
        %v1146 = vunpack.c.h.b16 %v1098
        %v1147 = vunpack.c.l.b16 %v1099
        %v1148 = vunpack.c.h.b16 %v1099
        %v1149 = vunpack.c.l.b16 %v1100
        %v1150 = vunpack.c.h.b16 %v1100
        %v1151 = vunpack.c.l.b16 %v1101
        %v1152 = vunpack.c.h.b16 %v1101
        %v1153 = vunpack.c.l.b16 %v1102
        %v1154 = vunpack.c.h.b16 %v1102
        %v1155 = vunpack.c.l.b16 %v1103
        %v1156 = vunpack.c.h.b16 %v1103
        %v1157 = vunpack.c.l.b16 %v1104
        %v1158 = vunpack.c.h.b16 %v1104
        %v1159 = vunpack.c.l.b16 %v1105
        %v1160 = vunpack.c.h.b16 %v1105
        %v1161 = vunpack.c.l.b16 %v1106
        %v1162 = vunpack.c.h.b16 %v1106
        %v1163 = vunpack.c.l.b16 %v1107
        %v1164 = vunpack.c.h.b16 %v1107
        %v1165 = vunpack.c.l.b16 %v1108
        %v1166 = vunpack.c.h.b16 %v1108
        %v1167 = vunpack.c.l.b16 %v1109
        %v1168 = vunpack.c.h.b16 %v1109
        %v1169 = vunpack.c.l.b16 %v1110
        %v1170 = vunpack.c.h.b16 %v1110
        %v1171 = vpack.c.b16 %v1141, %v1139
        %v1172 = vpack.c.b16 %v1142, %v1140
        %v1173 = vpack.c.b16 %v1145, %v1143
        %v1174 = vpack.c.b16 %v1146, %v1144
        %v1175 = vpack.c.b16 %v1149, %v1147
        %v1176 = vpack.c.b16 %v1150, %v1148
        %v1177 = vpack.c.b16 %v1153, %v1151
        %v1178 = vpack.c.b16 %v1154, %v1152
        %v1179 = vpack.c.b16 %v1157, %v1155
        %v1180 = vpack.c.b16 %v1158, %v1156
        %v1181 = vpack.c.b16 %v1161, %v1159
        %v1182 = vpack.c.b16 %v1162, %v1160
        %v1183 = vpack.c.b16 %v1165, %v1163
        %v1184 = vpack.c.b16 %v1166, %v1164
        %v1185 = vpack.c.b16 %v1169, %v1167
        %v1186 = vpack.c.b16 %v1170, %v1168
        %1203 = vmatprep.subr.bf16.mxu0 %v1186
        %1204 = vmatpush1.bf16.msra.mxu0 %v1185
        %1205 = vmatprep.subr.bf16.mxu0 %v1184
        %1206 = vmatpush1.bf16.msra.mxu0 %v1183
        %1207 = vmatprep.subr.bf16.mxu0 %v1182
        %1208 = vmatpush1.bf16.msra.mxu0 %v1181
        %1209 = vmatprep.subr.bf16.mxu0 %v1180
        %1210 = vmatpush1.bf16.msra.mxu0 %v1179
        %1211 = vmatprep.subr.bf16.mxu0 %v1178
        %1212 = vmatpush1.bf16.msra.mxu0 %v1177
        %1213 = vmatprep.subr.bf16.mxu0 %v1176
        %1214 = vmatpush1.bf16.msra.mxu0 %v1175
        %1215 = vmatprep.subr.bf16.mxu0 %v1174
        %1216 = vmatpush1.bf16.msra.mxu0 %v1173
        %1217 = vmatprep.subr.bf16.mxu0 %v1172
        %1218 = vmatpush1.bf16.msra.mxu0 %v1171
        %1219 = vmatprep.subr.bf16.mxu0 0
        %1220 = vmatpush2.bf16.msra.mxu0 0
        %1221 = vmatprep.subr.bf16.mxu0 0
        %1222 = vmatpush2.bf16.msra.mxu0 0
        %1223 = vmatprep.subr.bf16.mxu0 0
        %1224 = vmatpush2.bf16.msra.mxu0 0
        %1225 = vmatprep.subr.bf16.mxu0 0
        %1226 = vmatpush2.bf16.msra.mxu0 0
        %1227 = vmatprep.subr.bf16.mxu0 0
        %1228 = vmatpush2.bf16.msra.mxu0 0
        %1229 = vmatprep.subr.bf16.mxu0 0
        %1230 = vmatpush2.bf16.msra.mxu0 0
        %1231 = vmatprep.subr.bf16.mxu0 0
        %1232 = vmatpush2.bf16.msra.mxu0 0
        %1233 = vmatprep.subr.bf16.mxu0 0
        %1234 = vmatpush2.bf16.msra.mxu0 0
        %1235 = vmatprep.mubr.bf16.mxu0 0
        %1236 = vmatmul.mubr.bf16.gmra.mxu0 %v459
        %v1237 = vpop.f32.mrf.mxu0
        %v1238 = vadd.f32 %v1116, %v1237
        %v1239 = vpop.f32.mrf.mxu0
        %v1240 = vadd.f32 %v1120, %v1239
        %v1241 = vpop.f32.mrf.mxu0
        %v1242 = vadd.f32 %v1116, %v1241
        %v1243 = vpop.f32.mrf.mxu0
        %v1244 = vadd.f32 %v1120, %v1243
        %1245 = vdwg.mxu0
        %v1246 = vadd.f32 %v1091, %v1238
        %v1247 = vadd.f32 %v1092, %v1240
        %v1248 = vadd.f32 %v1093, %v1242
        %v1249 = vadd.f32 %v1094, %v1244
        %v1250 = vpack.c.bf16 %v1248, %v1246
        %v1251 = vpack.c.bf16 %v1249, %v1247
        %v1254 = vunpack.c.l.b16 %v1250
        %v1255 = vunpack.c.l.b16 %v1251
        %v1256 = vunpack.c.h.b16 %v1250
        %v1257 = vunpack.c.h.b16 %v1251
        %v1258 = vpack.c.b16 %v1255, %v1254
        %v1259 = vpack.c.b16 %v1257, %v1256
        %1262 = vst [vmem:[%s426] sm:$0xff] %v1258
        %1263 = vst [vmem:[%s426 + $0x8] sm:$0xff] %v1259
        %s1264 = sand.u32 %s246, 1
        %s1265 = scalar_lea.sflag [#allocation5], %s1264
        %s1266 = sand.u32 %s246, 1
        %s1267 = smul.addr %s1266, 16
        %s1268 = scalar_lea.vmem [#allocation12], %s1267
        // Predicated region
        $region81: #{tpu_custom_call.1} parent=55 // pred_check
          %p1269 = pneg %p256
        $region82: #{tpu_custom_call.1} parent=55 // pred_check_branch
          %1271 = sbr.rel (%p1269) target = $region84
        $region83: #{tpu_custom_call.1} parent=55 // pred_region
          %s1272 = smul.u32 2, %s33
          %s1274 = ssub.s32 256, 256
          %1275 = vsyncadd %s1265, %s1274
          %s1276 = smul.addr %s1272, 2
          %s1277 = smul.addr %s32, 8
          %s1278 = sadd.s32 %s1276, %s1277
          %s1279 = smul.addr %s1278, 64
          %s1280 = scalar_lea.hbm %s9, %s1279
          %s1281 = sshll.u32 %s1268, 4
          %s1282 = int_to_ptr.vmem [resolvable:$true] %s1281
          %1287 = dma.vmem_to_hbm [thread:$0]  %s1282, 256, %s1280, %s1265, 128, 128, 8
        $region84: #{tpu_custom_call.1} parent=55 // pred_fallthru
          _
      $region56: #{tpu_custom_call.1} parent=5 // pred_fallthru
        _
      %p1288 = scmp.le.s32.totalorder 2, %s23
      // Predicated region
      $region85: #{tpu_custom_call.1} parent=5 // pred_check
        %p1289 = pneg %p1288
      $region86: #{tpu_custom_call.1} parent=5 // pred_check_branch
        %1291 = sbr.rel (%p1289) target = $region88
      $region87: #{tpu_custom_call.1} parent=5 // pred_region
        %s1292 = ssub.s32 %s23, 2
        // Predicated region
        $region89: #{tpu_custom_call.1} parent=87 // pred_check
          %p1293 = pneg %p262
        $region90: #{tpu_custom_call.1} parent=87 // pred_check_branch
          %1295 = sbr.rel (%p1293) target = $region92
        $region91: #{tpu_custom_call.1} parent=87 // pred_region
          %s1296 = sand.u32 %s247, 1
          %s1297 = scalar_lea.sflag [#allocation5], %s1296
          %s1298 = sand.u32 %s247, 1
          %s1299 = smul.addr %s1298, 16
          %s1300 = scalar_lea.vmem [#allocation12], %s1299
          %1301 = dma.done %s1297, 256
        $region92: #{tpu_custom_call.1} parent=87 // pred_fallthru
          _
      $region88: #{tpu_custom_call.1} parent=5 // pred_fallthru
        _
    $region6: #{tpu_custom_call.1} parent=1 // loop_footer
      %s27 = sadd.s32 1, %s23
    $region7: #{tpu_custom_call.1} parent=1 // loop_footer_branch
      %22 = sbr.rel target = $region3
    $region8: #{tpu_custom_call.1} parent=1 // loop_exit
      _
    %1302 = vsyncpa [#allocation4], 1
    %s1303 = scalar_lea.sflag [#allocation4], 1
    %1304 = vsyncpa %s1303, 1
    %1305 = vsyncpa [#allocation7], 1
    %1306 = vsyncpa [#allocation10], 1
    %1307 = vsyncpa [#allocation5], 1
    %s1308 = scalar_lea.sflag [#allocation5], 1
    %1309 = vsyncpa %s1308, 1

</llo_original>
